<compile_context>
chip_gen: v6e
topology: v6e:2x2x1
jax: 0.10.0
libtpu: 0.0.40
codegen_flags: <defaults>
</compile_context>

<pallas_src>
import jax
import jax.numpy as jnp
from jax import lax
from jax.experimental import pallas as pl
from jax.experimental.pallas import tpu as pltpu


def _make_lstm_chunk_kernel(mxu_dtype):
    def kernel(x_ref, wx_ref, wh_ref, b_ref, we_ref,
               yt_ref, hy_ref, cy_ref, xg_ref):
        chunk = pl.program_id(0)
        M = hy_ref.shape[0]
        Fdim = hy_ref.shape[1]
        T = x_ref.shape[0] // M            # timesteps in this chunk (static)

        # hidden_state_edge is None -> zero-initialize the resident state blocks.
        # yt is also zeroed once so the constant-index output block is never left
        # uninitialized under multi-chunk writeback.
        @pl.when(chunk == 0)
        def _():
            hy_ref[...] = jnp.zeros_like(hy_ref)
            cy_ref[...] = jnp.zeros_like(cy_ref)
            yt_ref[...] = jnp.zeros_like(yt_ref)

        wh = wh_ref[...]                   # (F, 4F)  mxu_dtype, columns [i, f, o, g]
        we = we_ref[...]                   # (F, F)   mxu_dtype

        # Hoisted input projection for the WHOLE chunk: one (T*M, F) x (F, 4F)
        # matmul, bias folded in. Only the h @ W_h matmul remains on the
        # strictly-sequential per-step chain.
        xg_ref[...] = (
            jnp.dot(x_ref[...], wx_ref[...], preferred_element_type=jnp.float32)
            + b_ref[...]
        )                                  # (T*M, 4F) f32

        h0 = hy_ref[...]                   # (M, F) f32, carried across chunks
        c0 = cy_ref[...]                   # (M, F) f32

        def step(t, carry):
            h, c = carry
            row = pl.multiple_of(t * M, M)                      # sublane-aligned
            gates = xg_ref[pl.ds(row, M), :] + jnp.dot(
                h.astype(mxu_dtype), wh,
                preferred_element_type=jnp.float32)             # (M, 4F) f32
            # One contiguous sigmoid over [i | f | o], one tanh over [g]
            # (2 EUP chains instead of 4).
            sig = jax.nn.sigmoid(gates[:, : 3 * Fdim])
            g = jnp.tanh(gates[:, 3 * Fdim:])
            i = sig[:, :Fdim]
            f = sig[:, Fdim:2 * Fdim]
            o = sig[:, 2 * Fdim:]
            c_new = f * c + i * g
            h_new = o * jnp.tanh(c_new)
            return (h_new, c_new)

        # Cap the unroll: full unroll only for short chunks.
        h_fin, c_fin = lax.fori_loop(0, T, step, (h0, c0), unroll=min(T, 8))

        hy_ref[...] = h_fin
        cy_ref[...] = c_fin

        # yt = sigmoid(hy @ W_edge): only the final timestep's yt is returned.
        @pl.when(chunk == pl.num_programs(0) - 1)
        def _():
            yt_ref[...] = jax.nn.sigmoid(
                jnp.dot(h_fin.astype(mxu_dtype), we,
                        preferred_element_type=jnp.float32))

    return kernel


def encoder_lstm_forward(inputs_edge, w_gate, b_gate, w_edge, *,
                         mxu_dtype=jnp.bfloat16, t_chunk=None):
    """inputs_edge: (P, B, N, F).  w_gate: (2F, 4F) (pre-transposed nn.Linear weight),
    b_gate: (4F,), w_edge: (F, F).  Returns (yt, (hy, cy)), each (B, N, F) f32."""
    P, B, N, F = inputs_edge.shape
    M = B * N
    if t_chunk is None:
        # Short sequences: one chunk. Long (even) sequences: >=2 chunks so the next
        # x slab's DMA overlaps the current chunk's recurrence (double-buffering).
        t_chunk = P if (P <= 32 or P % 2) else P // 2
    assert P % t_chunk == 0, "t_chunk must divide the sequence length"
    num_chunks = P // t_chunk

    # Time-major 2-D sequence slab: row t*M + m is timestep t, flat (batch, vertex) m.
    # Cast to the MXU dtype wrapper-side (halves DMA bytes for bf16).
    x2d = inputs_edge.reshape(P * M, F).astype(mxu_dtype)

    # PyTorch gate column order is [i, f, g, o]; permute to [i, f, o, g] so one
    # contiguous sigmoid covers the first 3F lanes and one tanh covers the last F.
    wg = w_gate.astype(jnp.float32)                       # (2F, 4F)
    bg = b_gate.astype(jnp.float32)                       # (4F,)
    perm_cols = lambda a: jnp.concatenate(
        [a[..., 0 * F:1 * F], a[..., 1 * F:2 * F],
         a[..., 3 * F:4 * F], a[..., 2 * F:3 * F]], axis=-1)
    wg_p = perm_cols(wg)
    b_p = perm_cols(bg).reshape(1, 4 * F)                 # f32 (added post-MXU)

    # Split the gate weight: rows [:F] multiply x, rows [F:] multiply hx (cat order).
    w_x = wg_p[:F].astype(mxu_dtype)                      # (F, 4F)
    w_h = wg_p[F:].astype(mxu_dtype)                      # (F, 4F)
    w_e = w_edge.astype(mxu_dtype)                        # (F, F)

    kernel = _make_lstm_chunk_kernel(mxu_dtype)

    grid_spec = pltpu.PrefetchScalarGridSpec(
        num_scalar_prefetch=0,
        grid=(num_chunks,),
        in_specs=[
            pl.BlockSpec((t_chunk * M, F), lambda c: (c, 0)),      # x chunk (T*M, F)
            pl.BlockSpec((F, 4 * F), lambda c: (0, 0)),            # W_x
            pl.BlockSpec((F, 4 * F), lambda c: (0, 0)),            # W_h
            pl.BlockSpec((1, 4 * F), lambda c: (0, 0)),            # bias (f32)
            pl.BlockSpec((F, F), lambda c: (0, 0)),                # W_edge
        ],
        out_specs=[
            pl.BlockSpec((M, F), lambda c: (0, 0)),                # yt (last step)
            pl.BlockSpec((M, F), lambda c: (0, 0)),                # hy (state carry)
            pl.BlockSpec((M, F), lambda c: (0, 0)),                # cy (state carry)
        ],
        scratch_shapes=[
            pltpu.VMEM((t_chunk * M, 4 * F), jnp.float32),         # precomputed xg
        ],
    )

    # VMEM budget: bump the scoped limit only if the chunk working set needs it
    # (v7x: 32 MiB default scoped / 64 MiB physical).
    itemsize = jnp.dtype(mxu_dtype).itemsize
    vmem_est = (2 * t_chunk * M * F * itemsize             # double-buffered x slab
                + t_chunk * M * 4 * F * 4                  # xg scratch (f32)
                + 2 * (2 * F * 4 * F + F * F) * itemsize   # weights (double-buffered)
                + 2 * 4 * F * 4                            # bias
                + 2 * 3 * M * F * 4)                       # outputs
    cp_kwargs = dict(dimension_semantics=("arbitrary",))   # sequential recurrence
    if vmem_est > 24 * 1024 * 1024:
        cp_kwargs["vmem_limit_bytes"] = min(int(vmem_est * 3 // 2), 100 * 1024 * 1024)

    yt, hy, cy = pl.pallas_call(
        kernel,
        out_shape=(
            jax.ShapeDtypeStruct((M, F), jnp.float32),
            jax.ShapeDtypeStruct((M, F), jnp.float32),
            jax.ShapeDtypeStruct((M, F), jnp.float32),
        ),
        grid_spec=grid_spec,
        compiler_params=pltpu.CompilerParams(**cp_kwargs),
    )(x2d, w_x, w_h, b_p, w_e)

    return (yt.reshape(B, N, F), (hy.reshape(B, N, F), cy.reshape(B, N, F)))


def _reference(inputs_edge, w_gate, b_gate, w_edge):
    P, B, N, F = inputs_edge.shape
    hx = jnp.zeros((B, N, F), jnp.float32)
    cx = jnp.zeros((B, N, F), jnp.float32)
    yt = None
    for t in range(P):
        x = inputs_edge[t]
        combined = jnp.concatenate([x, hx], axis=2)
        gates = combined @ w_gate + b_gate
        i = jax.nn.sigmoid(gates[..., 0 * F:1 * F])
        f = jax.nn.sigmoid(gates[..., 1 * F:2 * F])
        g = jnp.tanh(gates[..., 2 * F:3 * F])
        o = jax.nn.sigmoid(gates[..., 3 * F:4 * F])
        cy = f * cx + i * g
        hy = o * jnp.tanh(cy)
        yt = jax.nn.sigmoid(hy @ w_edge)
        hx, cx = hy, cy
    return yt, (hx, cx)


if __name__ == "__main__":
    # Small shapes consistent with the forward: (P, B, N, F)
    P, B, N, F = 8, 2, 8, 32
    key = jax.random.PRNGKey(0)
    k1, k2, k3, k4 = jax.random.split(key, 4)

    inputs_edge = jax.random.normal(k1, (P, B, N, F), jnp.float32)
    # nn.Linear(2F -> 4F): weight (4F, 2F); passed pre-transposed as (2F, 4F).
    w_gate = jax.random.normal(k2, (2 * F, 4 * F), jnp.float32) * 0.1
    b_gate = jax.random.normal(k3, (4 * F,), jnp.float32) * 0.1
    w_edge = jax.random.normal(k4, (F, F), jnp.float32) * 0.1
    # NOTE: self.b_edge exists in __init__ but is unused in forward, so omitted.

    yt_r, (hy_r, cy_r) = _reference(inputs_edge, w_gate, b_gate, w_edge)

    # f32 MXU path (exact match to reference).
    yt, (hy, cy) = encoder_lstm_forward(
        inputs_edge, w_gate, b_gate, w_edge, mxu_dtype=jnp.float32)
    jax.block_until_ready((yt, hy, cy))
    assert jnp.allclose(yt, yt_r, atol=1e-5, rtol=1e-5)
    assert jnp.allclose(hy, hy_r, atol=1e-5, rtol=1e-5)
    assert jnp.allclose(cy, cy_r, atol=1e-5, rtol=1e-5)

    # Multi-chunk path (num_chunks=2), f32 exact: exercises the state carry across
    # grid steps and the overlapped-DMA configuration.
    yt_c, (hy_c, cy_c) = encoder_lstm_forward(
        inputs_edge, w_gate, b_gate, w_edge, mxu_dtype=jnp.float32, t_chunk=4)
    jax.block_until_ready((yt_c, hy_c, cy_c))
    assert jnp.allclose(yt_c, yt_r, atol=1e-5, rtol=1e-5)
    assert jnp.allclose(hy_c, hy_r, atol=1e-5, rtol=1e-5)
    assert jnp.allclose(cy_c, cy_r, atol=1e-5, rtol=1e-5)

    # Default bf16-at-MXU path (all generations; f32 accumulate + f32 state).
    # Error grows with P through the sequential recurrence; loose tolerance at P=8.
    yt_b, (hy_b, cy_b) = encoder_lstm_forward(inputs_edge, w_gate, b_gate, w_edge)
    jax.block_until_ready((yt_b, hy_b, cy_b))
    assert jnp.allclose(yt_b, yt_r, atol=1e-1)
    assert jnp.allclose(hy_b, hy_r, atol=1e-1)
    assert jnp.allclose(cy_b, cy_r, atol=1e-1)

    print("KERNEL_OK")
</pallas_src>

<mosaic_0001>
module attributes {stable_mosaic.version = 11 : i64} {
  func.func @kernel(%arg0: i32, %arg1: memref<128x32xf32, #tpu.memory_space<vmem>>, %arg2: memref<32x128xf32, #tpu.memory_space<vmem>>, %arg3: memref<32x128xf32, #tpu.memory_space<vmem>>, %arg4: memref<1x128xf32, #tpu.memory_space<vmem>>, %arg5: memref<32x32xf32, #tpu.memory_space<vmem>>, %arg6: memref<16x32xf32, #tpu.memory_space<vmem>>, %arg7: memref<16x32xf32, #tpu.memory_space<vmem>>, %arg8: memref<16x32xf32, #tpu.memory_space<vmem>>, %arg9: memref<128x128xf32, #tpu.memory_space<vmem>>) attributes {dimension_semantics = [#tpu.dimension_semantics<arbitrary>], iteration_bounds = array<i64: 1>, scalar_prefetch = 0 : i64, scratch_operands = 1 : i64, tpu.core_type = #tpu.core_type<tc>, window_params = [{transform_indices = @transform_0, window_bounds = array<i64: 128, 32>}, {pipeline_mode = #tpu.pipeline_mode<synchronous>, transform_indices = @transform_1, window_bounds = array<i64: 32, 128>}, {pipeline_mode = #tpu.pipeline_mode<synchronous>, transform_indices = @transform_2, window_bounds = array<i64: 32, 128>}, {pipeline_mode = #tpu.pipeline_mode<synchronous>, transform_indices = @transform_3, window_bounds = array<i64: 1, 128>}, {pipeline_mode = #tpu.pipeline_mode<synchronous>, transform_indices = @transform_4, window_bounds = array<i64: 32, 32>}, {pipeline_mode = #tpu.pipeline_mode<synchronous>, transform_indices = @transform_5, window_bounds = array<i64: 16, 32>}, {pipeline_mode = #tpu.pipeline_mode<synchronous>, transform_indices = @transform_6, window_bounds = array<i64: 16, 32>}, {pipeline_mode = #tpu.pipeline_mode<synchronous>, transform_indices = @transform_7, window_bounds = array<i64: 16, 32>}]} {
    %c0_i32 = arith.constant 0 : i32
    %0 = arith.cmpi eq, %arg0, %c0_i32 : i32
    %1 = arith.extui %0 : i1 to i32
    %c0_i32_0 = arith.constant 0 : i32
    %2 = arith.cmpi ne, %1, %c0_i32_0 : i32
    scf.if %2 {
      %cst_54 = arith.constant 0.000000e+00 : f32
      %195 = vector.broadcast %cst_54 : f32 to vector<16x32xf32>
      %c0_55 = arith.constant 0 : index
      %c0_56 = arith.constant 0 : index
      %196 = vector.load %arg7[%c0_55, %c0_56] : memref<16x32xf32, #tpu.memory_space<vmem>>, vector<16x32xf32>
      tpu.vector_store %arg7[%c0_55, %c0_56], %195 {strides = array<i32>} : memref<16x32xf32, #tpu.memory_space<vmem>>, vector<16x32xf32>,
      %cst_57 = arith.constant 0.000000e+00 : f32
      %197 = vector.broadcast %cst_57 : f32 to vector<16x32xf32>
      %c0_58 = arith.constant 0 : index
      %c0_59 = arith.constant 0 : index
      %198 = vector.load %arg8[%c0_58, %c0_59] : memref<16x32xf32, #tpu.memory_space<vmem>>, vector<16x32xf32>
      tpu.vector_store %arg8[%c0_58, %c0_59], %197 {strides = array<i32>} : memref<16x32xf32, #tpu.memory_space<vmem>>, vector<16x32xf32>,
      %cst_60 = arith.constant 0.000000e+00 : f32
      %199 = vector.broadcast %cst_60 : f32 to vector<16x32xf32>
      %c0_61 = arith.constant 0 : index
      %c0_62 = arith.constant 0 : index
      %200 = vector.load %arg6[%c0_61, %c0_62] : memref<16x32xf32, #tpu.memory_space<vmem>>, vector<16x32xf32>
      tpu.vector_store %arg6[%c0_61, %c0_62], %199 {strides = array<i32>} : memref<16x32xf32, #tpu.memory_space<vmem>>, vector<16x32xf32>,
    } else {
    }
    %c0 = arith.constant 0 : index
    %c0_1 = arith.constant 0 : index
    %3 = vector.load %arg3[%c0, %c0_1] : memref<32x128xf32, #tpu.memory_space<vmem>>, vector<32x128xf32>
    %c0_2 = arith.constant 0 : index
    %c0_3 = arith.constant 0 : index
    %4 = vector.load %arg5[%c0_2, %c0_3] : memref<32x32xf32, #tpu.memory_space<vmem>>, vector<32x32xf32>
    %c0_4 = arith.constant 0 : index
    %c0_5 = arith.constant 0 : index
    %5 = vector.load %arg1[%c0_4, %c0_5] : memref<128x32xf32, #tpu.memory_space<vmem>>, vector<128x32xf32>
    %c0_6 = arith.constant 0 : index
    %c0_7 = arith.constant 0 : index
    %6 = vector.load %arg2[%c0_6, %c0_7] : memref<32x128xf32, #tpu.memory_space<vmem>>, vector<32x128xf32>
    %cst = arith.constant dense<0.000000e+00> : vector<128x128xf32>
    %7 = tpu.matmul %5, %6, %cst {dimension_numbers = #tpu.dot_dimension_numbers<[1], [0], [0], [1], [0, 0, 1, 1], [], []>} : vector<128x32xf32>, vector<32x128xf32>, vector<128x128xf32> -> vector<128x128xf32>
    %c0_8 = arith.constant 0 : index
    %c0_9 = arith.constant 0 : index
    %8 = vector.load %arg4[%c0_8, %c0_9] : memref<1x128xf32, #tpu.memory_space<vmem>>, vector<1x128xf32>
    %9 = vector.broadcast %8 : vector<1x128xf32> to vector<128x128xf32>
    %10 = arith.addf %7, %9 : vector<128x128xf32>
    %c0_10 = arith.constant 0 : index
    %c0_11 = arith.constant 0 : index
    %11 = vector.load %arg9[%c0_10, %c0_11] : memref<128x128xf32, #tpu.memory_space<vmem>>, vector<128x128xf32>
    tpu.vector_store %arg9[%c0_10, %c0_11], %10 {strides = array<i32>} : memref<128x128xf32, #tpu.memory_space<vmem>>, vector<128x128xf32>,
    %c0_12 = arith.constant 0 : index
    %c0_13 = arith.constant 0 : index
    %12 = vector.load %arg7[%c0_12, %c0_13] : memref<16x32xf32, #tpu.memory_space<vmem>>, vector<16x32xf32>
    %c0_14 = arith.constant 0 : index
    %c0_15 = arith.constant 0 : index
    %13 = vector.load %arg8[%c0_14, %c0_15] : memref<16x32xf32, #tpu.memory_space<vmem>>, vector<16x32xf32>
    %c0_i32_16 = arith.constant 0 : i32
    %c16_i32 = arith.constant 16 : i32
    %14 = arith.muli %c0_i32_16, %c16_i32 : i32
    %15 = tpu.assume_multiple %14, 16 : i32
    %16 = arith.index_cast %15 : i32 to index
    %c0_17 = arith.constant 0 : index
    %17 = vector.load %arg9[%16, %c0_17] : memref<128x128xf32, #tpu.memory_space<vmem>>, vector<16x128xf32>
    %cst_18 = arith.constant dense<0.000000e+00> : vector<16x128xf32>
    %18 = tpu.matmul %12, %3, %cst_18 {dimension_numbers = #tpu.dot_dimension_numbers<[1], [0], [0], [1], [0, 0, 1, 1], [], []>} : vector<16x32xf32>, vector<32x128xf32>, vector<16x128xf32> -> vector<16x128xf32>
    %19 = arith.addf %17, %18 : vector<16x128xf32>
    %20 = vector.extract_strided_slice %19 {offsets = [0, 0], sizes = [16, 96], strides = [1, 1]} : vector<16x128xf32> to vector<16x96xf32>
    %21 = arith.negf %20 : vector<16x96xf32>
    %22 = math.exp %21 : vector<16x96xf32>
    %cst_19 = arith.constant 1.000000e+00 : f32
    %23 = vector.broadcast %cst_19 : f32 to vector<16x96xf32>
    %24 = arith.addf %23, %22 : vector<16x96xf32>
    %25 = arith.divf %23, %24 : vector<16x96xf32>
    %26 = vector.extract_strided_slice %19 {offsets = [0, 96], sizes = [16, 32], strides = [1, 1]} : vector<16x128xf32> to vector<16x32xf32>
    %27 = math.tanh %26 : vector<16x32xf32>
    %28 = vector.extract_strided_slice %25 {offsets = [0, 0], sizes = [16, 32], strides = [1, 1]} : vector<16x96xf32> to vector<16x32xf32>
    %29 = vector.extract_strided_slice %25 {offsets = [0, 32], sizes = [16, 32], strides = [1, 1]} : vector<16x96xf32> to vector<16x32xf32>
    %30 = vector.extract_strided_slice %25 {offsets = [0, 64], sizes = [16, 32], strides = [1, 1]} : vector<16x96xf32> to vector<16x32xf32>
    %31 = arith.mulf %29, %13 : vector<16x32xf32>
    %32 = arith.mulf %28, %27 : vector<16x32xf32>
    %33 = arith.addf %31, %32 : vector<16x32xf32>
    %34 = math.tanh %33 : vector<16x32xf32>
    %35 = arith.mulf %30, %34 : vector<16x32xf32>
    %c1_i32 = arith.constant 1 : i32
    %c16_i32_20 = arith.constant 16 : i32
    %36 = arith.muli %c1_i32, %c16_i32_20 : i32
    %37 = tpu.assume_multiple %36, 16 : i32
    %38 = arith.index_cast %37 : i32 to index
    %c0_21 = arith.constant 0 : index
    %39 = vector.load %arg9[%38, %c0_21] : memref<128x128xf32, #tpu.memory_space<vmem>>, vector<16x128xf32>
    %cst_22 = arith.constant dense<0.000000e+00> : vector<16x128xf32>
    %40 = tpu.matmul %35, %3, %cst_22 {dimension_numbers = #tpu.dot_dimension_numbers<[1], [0], [0], [1], [0, 0, 1, 1], [], []>} : vector<16x32xf32>, vector<32x128xf32>, vector<16x128xf32> -> vector<16x128xf32>
    %41 = arith.addf %39, %40 : vector<16x128xf32>
    %42 = vector.extract_strided_slice %41 {offsets = [0, 0], sizes = [16, 96], strides = [1, 1]} : vector<16x128xf32> to vector<16x96xf32>
    %43 = arith.negf %42 : vector<16x96xf32>
    %44 = math.exp %43 : vector<16x96xf32>
    %cst_23 = arith.constant 1.000000e+00 : f32
    %45 = vector.broadcast %cst_23 : f32 to vector<16x96xf32>
    %46 = arith.addf %45, %44 : vector<16x96xf32>
    %47 = arith.divf %45, %46 : vector<16x96xf32>
    %48 = vector.extract_strided_slice %41 {offsets = [0, 96], sizes = [16, 32], strides = [1, 1]} : vector<16x128xf32> to vector<16x32xf32>
    %49 = math.tanh %48 : vector<16x32xf32>
    %50 = vector.extract_strided_slice %47 {offsets = [0, 0], sizes = [16, 32], strides = [1, 1]} : vector<16x96xf32> to vector<16x32xf32>
    %51 = vector.extract_strided_slice %47 {offsets = [0, 32], sizes = [16, 32], strides = [1, 1]} : vector<16x96xf32> to vector<16x32xf32>
    %52 = vector.extract_strided_slice %47 {offsets = [0, 64], sizes = [16, 32], strides = [1, 1]} : vector<16x96xf32> to vector<16x32xf32>
    %53 = arith.mulf %51, %33 : vector<16x32xf32>
    %54 = arith.mulf %50, %49 : vector<16x32xf32>
    %55 = arith.addf %53, %54 : vector<16x32xf32>
    %56 = math.tanh %55 : vector<16x32xf32>
    %57 = arith.mulf %52, %56 : vector<16x32xf32>
    %c2_i32 = arith.constant 2 : i32
    %c16_i32_24 = arith.constant 16 : i32
    %58 = arith.muli %c2_i32, %c16_i32_24 : i32
    %59 = tpu.assume_multiple %58, 16 : i32
    %60 = arith.index_cast %59 : i32 to index
    %c0_25 = arith.constant 0 : index
    %61 = vector.load %arg9[%60, %c0_25] : memref<128x128xf32, #tpu.memory_space<vmem>>, vector<16x128xf32>
    %cst_26 = arith.constant dense<0.000000e+00> : vector<16x128xf32>
    %62 = tpu.matmul %57, %3, %cst_26 {dimension_numbers = #tpu.dot_dimension_numbers<[1], [0], [0], [1], [0, 0, 1, 1], [], []>} : vector<16x32xf32>, vector<32x128xf32>, vector<16x128xf32> -> vector<16x128xf32>
    %63 = arith.addf %61, %62 : vector<16x128xf32>
    %64 = vector.extract_strided_slice %63 {offsets = [0, 0], sizes = [16, 96], strides = [1, 1]} : vector<16x128xf32> to vector<16x96xf32>
    %65 = arith.negf %64 : vector<16x96xf32>
    %66 = math.exp %65 : vector<16x96xf32>
    %cst_27 = arith.constant 1.000000e+00 : f32
    %67 = vector.broadcast %cst_27 : f32 to vector<16x96xf32>
    %68 = arith.addf %67, %66 : vector<16x96xf32>
    %69 = arith.divf %67, %68 : vector<16x96xf32>
    %70 = vector.extract_strided_slice %63 {offsets = [0, 96], sizes = [16, 32], strides = [1, 1]} : vector<16x128xf32> to vector<16x32xf32>
    %71 = math.tanh %70 : vector<16x32xf32>
    %72 = vector.extract_strided_slice %69 {offsets = [0, 0], sizes = [16, 32], strides = [1, 1]} : vector<16x96xf32> to vector<16x32xf32>
    %73 = vector.extract_strided_slice %69 {offsets = [0, 32], sizes = [16, 32], strides = [1, 1]} : vector<16x96xf32> to vector<16x32xf32>
    %74 = vector.extract_strided_slice %69 {offsets = [0, 64], sizes = [16, 32], strides = [1, 1]} : vector<16x96xf32> to vector<16x32xf32>
    %75 = arith.mulf %73, %55 : vector<16x32xf32>
    %76 = arith.mulf %72, %71 : vector<16x32xf32>
    %77 = arith.addf %75, %76 : vector<16x32xf32>
    %78 = math.tanh %77 : vector<16x32xf32>
    %79 = arith.mulf %74, %78 : vector<16x32xf32>
    %c3_i32 = arith.constant 3 : i32
    %c16_i32_28 = arith.constant 16 : i32
    %80 = arith.muli %c3_i32, %c16_i32_28 : i32
    %81 = tpu.assume_multiple %80, 16 : i32
    %82 = arith.index_cast %81 : i32 to index
    %c0_29 = arith.constant 0 : index
    %83 = vector.load %arg9[%82, %c0_29] : memref<128x128xf32, #tpu.memory_space<vmem>>, vector<16x128xf32>
    %cst_30 = arith.constant dense<0.000000e+00> : vector<16x128xf32>
    %84 = tpu.matmul %79, %3, %cst_30 {dimension_numbers = #tpu.dot_dimension_numbers<[1], [0], [0], [1], [0, 0, 1, 1], [], []>} : vector<16x32xf32>, vector<32x128xf32>, vector<16x128xf32> -> vector<16x128xf32>
    %85 = arith.addf %83, %84 : vector<16x128xf32>
    %86 = vector.extract_strided_slice %85 {offsets = [0, 0], sizes = [16, 96], strides = [1, 1]} : vector<16x128xf32> to vector<16x96xf32>
    %87 = arith.negf %86 : vector<16x96xf32>
    %88 = math.exp %87 : vector<16x96xf32>
    %cst_31 = arith.constant 1.000000e+00 : f32
    %89 = vector.broadcast %cst_31 : f32 to vector<16x96xf32>
    %90 = arith.addf %89, %88 : vector<16x96xf32>
    %91 = arith.divf %89, %90 : vector<16x96xf32>
    %92 = vector.extract_strided_slice %85 {offsets = [0, 96], sizes = [16, 32], strides = [1, 1]} : vector<16x128xf32> to vector<16x32xf32>
    %93 = math.tanh %92 : vector<16x32xf32>
    %94 = vector.extract_strided_slice %91 {offsets = [0, 0], sizes = [16, 32], strides = [1, 1]} : vector<16x96xf32> to vector<16x32xf32>
    %95 = vector.extract_strided_slice %91 {offsets = [0, 32], sizes = [16, 32], strides = [1, 1]} : vector<16x96xf32> to vector<16x32xf32>
    %96 = vector.extract_strided_slice %91 {offsets = [0, 64], sizes = [16, 32], strides = [1, 1]} : vector<16x96xf32> to vector<16x32xf32>
    %97 = arith.mulf %95, %77 : vector<16x32xf32>
    %98 = arith.mulf %94, %93 : vector<16x32xf32>
    %99 = arith.addf %97, %98 : vector<16x32xf32>
    %100 = math.tanh %99 : vector<16x32xf32>
    %101 = arith.mulf %96, %100 : vector<16x32xf32>
    %c4_i32 = arith.constant 4 : i32
    %c16_i32_32 = arith.constant 16 : i32
    %102 = arith.muli %c4_i32, %c16_i32_32 : i32
    %103 = tpu.assume_multiple %102, 16 : i32
    %104 = arith.index_cast %103 : i32 to index
    %c0_33 = arith.constant 0 : index
    %105 = vector.load %arg9[%104, %c0_33] : memref<128x128xf32, #tpu.memory_space<vmem>>, vector<16x128xf32>
    %cst_34 = arith.constant dense<0.000000e+00> : vector<16x128xf32>
    %106 = tpu.matmul %101, %3, %cst_34 {dimension_numbers = #tpu.dot_dimension_numbers<[1], [0], [0], [1], [0, 0, 1, 1], [], []>} : vector<16x32xf32>, vector<32x128xf32>, vector<16x128xf32> -> vector<16x128xf32>
    %107 = arith.addf %105, %106 : vector<16x128xf32>
    %108 = vector.extract_strided_slice %107 {offsets = [0, 0], sizes = [16, 96], strides = [1, 1]} : vector<16x128xf32> to vector<16x96xf32>
    %109 = arith.negf %108 : vector<16x96xf32>
    %110 = math.exp %109 : vector<16x96xf32>
    %cst_35 = arith.constant 1.000000e+00 : f32
    %111 = vector.broadcast %cst_35 : f32 to vector<16x96xf32>
    %112 = arith.addf %111, %110 : vector<16x96xf32>
    %113 = arith.divf %111, %112 : vector<16x96xf32>
    %114 = vector.extract_strided_slice %107 {offsets = [0, 96], sizes = [16, 32], strides = [1, 1]} : vector<16x128xf32> to vector<16x32xf32>
    %115 = math.tanh %114 : vector<16x32xf32>
    %116 = vector.extract_strided_slice %113 {offsets = [0, 0], sizes = [16, 32], strides = [1, 1]} : vector<16x96xf32> to vector<16x32xf32>
    %117 = vector.extract_strided_slice %113 {offsets = [0, 32], sizes = [16, 32], strides = [1, 1]} : vector<16x96xf32> to vector<16x32xf32>
    %118 = vector.extract_strided_slice %113 {offsets = [0, 64], sizes = [16, 32], strides = [1, 1]} : vector<16x96xf32> to vector<16x32xf32>
    %119 = arith.mulf %117, %99 : vector<16x32xf32>
    %120 = arith.mulf %116, %115 : vector<16x32xf32>
    %121 = arith.addf %119, %120 : vector<16x32xf32>
    %122 = math.tanh %121 : vector<16x32xf32>
    %123 = arith.mulf %118, %122 : vector<16x32xf32>
    %c5_i32 = arith.constant 5 : i32
    %c16_i32_36 = arith.constant 16 : i32
    %124 = arith.muli %c5_i32, %c16_i32_36 : i32
    %125 = tpu.assume_multiple %124, 16 : i32
    %126 = arith.index_cast %125 : i32 to index
    %c0_37 = arith.constant 0 : index
    %127 = vector.load %arg9[%126, %c0_37] : memref<128x128xf32, #tpu.memory_space<vmem>>, vector<16x128xf32>
    %cst_38 = arith.constant dense<0.000000e+00> : vector<16x128xf32>
    %128 = tpu.matmul %123, %3, %cst_38 {dimension_numbers = #tpu.dot_dimension_numbers<[1], [0], [0], [1], [0, 0, 1, 1], [], []>} : vector<16x32xf32>, vector<32x128xf32>, vector<16x128xf32> -> vector<16x128xf32>
    %129 = arith.addf %127, %128 : vector<16x128xf32>
    %130 = vector.extract_strided_slice %129 {offsets = [0, 0], sizes = [16, 96], strides = [1, 1]} : vector<16x128xf32> to vector<16x96xf32>
    %131 = arith.negf %130 : vector<16x96xf32>
    %132 = math.exp %131 : vector<16x96xf32>
    %cst_39 = arith.constant 1.000000e+00 : f32
    %133 = vector.broadcast %cst_39 : f32 to vector<16x96xf32>
    %134 = arith.addf %133, %132 : vector<16x96xf32>
    %135 = arith.divf %133, %134 : vector<16x96xf32>
    %136 = vector.extract_strided_slice %129 {offsets = [0, 96], sizes = [16, 32], strides = [1, 1]} : vector<16x128xf32> to vector<16x32xf32>
    %137 = math.tanh %136 : vector<16x32xf32>
    %138 = vector.extract_strided_slice %135 {offsets = [0, 0], sizes = [16, 32], strides = [1, 1]} : vector<16x96xf32> to vector<16x32xf32>
    %139 = vector.extract_strided_slice %135 {offsets = [0, 32], sizes = [16, 32], strides = [1, 1]} : vector<16x96xf32> to vector<16x32xf32>
    %140 = vector.extract_strided_slice %135 {offsets = [0, 64], sizes = [16, 32], strides = [1, 1]} : vector<16x96xf32> to vector<16x32xf32>
    %141 = arith.mulf %139, %121 : vector<16x32xf32>
    %142 = arith.mulf %138, %137 : vector<16x32xf32>
    %143 = arith.addf %141, %142 : vector<16x32xf32>
    %144 = math.tanh %143 : vector<16x32xf32>
    %145 = arith.mulf %140, %144 : vector<16x32xf32>
    %c6_i32 = arith.constant 6 : i32
    %c16_i32_40 = arith.constant 16 : i32
    %146 = arith.muli %c6_i32, %c16_i32_40 : i32
    %147 = tpu.assume_multiple %146, 16 : i32
    %148 = arith.index_cast %147 : i32 to index
    %c0_41 = arith.constant 0 : index
    %149 = vector.load %arg9[%148, %c0_41] : memref<128x128xf32, #tpu.memory_space<vmem>>, vector<16x128xf32>
    %cst_42 = arith.constant dense<0.000000e+00> : vector<16x128xf32>
    %150 = tpu.matmul %145, %3, %cst_42 {dimension_numbers = #tpu.dot_dimension_numbers<[1], [0], [0], [1], [0, 0, 1, 1], [], []>} : vector<16x32xf32>, vector<32x128xf32>, vector<16x128xf32> -> vector<16x128xf32>
    %151 = arith.addf %149, %150 : vector<16x128xf32>
    %152 = vector.extract_strided_slice %151 {offsets = [0, 0], sizes = [16, 96], strides = [1, 1]} : vector<16x128xf32> to vector<16x96xf32>
    %153 = arith.negf %152 : vector<16x96xf32>
    %154 = math.exp %153 : vector<16x96xf32>
    %cst_43 = arith.constant 1.000000e+00 : f32
    %155 = vector.broadcast %cst_43 : f32 to vector<16x96xf32>
    %156 = arith.addf %155, %154 : vector<16x96xf32>
    %157 = arith.divf %155, %156 : vector<16x96xf32>
    %158 = vector.extract_strided_slice %151 {offsets = [0, 96], sizes = [16, 32], strides = [1, 1]} : vector<16x128xf32> to vector<16x32xf32>
    %159 = math.tanh %158 : vector<16x32xf32>
    %160 = vector.extract_strided_slice %157 {offsets = [0, 0], sizes = [16, 32], strides = [1, 1]} : vector<16x96xf32> to vector<16x32xf32>
    %161 = vector.extract_strided_slice %157 {offsets = [0, 32], sizes = [16, 32], strides = [1, 1]} : vector<16x96xf32> to vector<16x32xf32>
    %162 = vector.extract_strided_slice %157 {offsets = [0, 64], sizes = [16, 32], strides = [1, 1]} : vector<16x96xf32> to vector<16x32xf32>
    %163 = arith.mulf %161, %143 : vector<16x32xf32>
    %164 = arith.mulf %160, %159 : vector<16x32xf32>
    %165 = arith.addf %163, %164 : vector<16x32xf32>
    %166 = math.tanh %165 : vector<16x32xf32>
    %167 = arith.mulf %162, %166 : vector<16x32xf32>
    %c7_i32 = arith.constant 7 : i32
    %c16_i32_44 = arith.constant 16 : i32
    %168 = arith.muli %c7_i32, %c16_i32_44 : i32
    %169 = tpu.assume_multiple %168, 16 : i32
    %170 = arith.index_cast %169 : i32 to index
    %c0_45 = arith.constant 0 : index
    %171 = vector.load %arg9[%170, %c0_45] : memref<128x128xf32, #tpu.memory_space<vmem>>, vector<16x128xf32>
    %cst_46 = arith.constant dense<0.000000e+00> : vector<16x128xf32>
    %172 = tpu.matmul %167, %3, %cst_46 {dimension_numbers = #tpu.dot_dimension_numbers<[1], [0], [0], [1], [0, 0, 1, 1], [], []>} : vector<16x32xf32>, vector<32x128xf32>, vector<16x128xf32> -> vector<16x128xf32>
    %173 = arith.addf %171, %172 : vector<16x128xf32>
    %174 = vector.extract_strided_slice %173 {offsets = [0, 0], sizes = [16, 96], strides = [1, 1]} : vector<16x128xf32> to vector<16x96xf32>
    %175 = arith.negf %174 : vector<16x96xf32>
    %176 = math.exp %175 : vector<16x96xf32>
    %cst_47 = arith.constant 1.000000e+00 : f32
    %177 = vector.broadcast %cst_47 : f32 to vector<16x96xf32>
    %178 = arith.addf %177, %176 : vector<16x96xf32>
    %179 = arith.divf %177, %178 : vector<16x96xf32>
    %180 = vector.extract_strided_slice %173 {offsets = [0, 96], sizes = [16, 32], strides = [1, 1]} : vector<16x128xf32> to vector<16x32xf32>
    %181 = math.tanh %180 : vector<16x32xf32>
    %182 = vector.extract_strided_slice %179 {offsets = [0, 0], sizes = [16, 32], strides = [1, 1]} : vector<16x96xf32> to vector<16x32xf32>
    %183 = vector.extract_strided_slice %179 {offsets = [0, 32], sizes = [16, 32], strides = [1, 1]} : vector<16x96xf32> to vector<16x32xf32>
    %184 = vector.extract_strided_slice %179 {offsets = [0, 64], sizes = [16, 32], strides = [1, 1]} : vector<16x96xf32> to vector<16x32xf32>
    %185 = arith.mulf %183, %165 : vector<16x32xf32>
    %186 = arith.mulf %182, %181 : vector<16x32xf32>
    %187 = arith.addf %185, %186 : vector<16x32xf32>
    %188 = math.tanh %187 : vector<16x32xf32>
    %189 = arith.mulf %184, %188 : vector<16x32xf32>
    %c8_i32 = arith.constant 8 : i32
    %c0_48 = arith.constant 0 : index
    %c0_49 = arith.constant 0 : index
    %190 = vector.load %arg7[%c0_48, %c0_49] : memref<16x32xf32, #tpu.memory_space<vmem>>, vector<16x32xf32>
    tpu.vector_store %arg7[%c0_48, %c0_49], %189 {strides = array<i32>} : memref<16x32xf32, #tpu.memory_space<vmem>>, vector<16x32xf32>,
    %c0_50 = arith.constant 0 : index
    %c0_51 = arith.constant 0 : index
    %191 = vector.load %arg8[%c0_50, %c0_51] : memref<16x32xf32, #tpu.memory_space<vmem>>, vector<16x32xf32>
    tpu.vector_store %arg8[%c0_50, %c0_51], %187 {strides = array<i32>} : memref<16x32xf32, #tpu.memory_space<vmem>>, vector<16x32xf32>,
    %c0_i32_52 = arith.constant 0 : i32
    %192 = arith.cmpi eq, %arg0, %c0_i32_52 : i32
    %193 = arith.extui %192 : i1 to i32
    %c0_i32_53 = arith.constant 0 : i32
    %194 = arith.cmpi ne, %193, %c0_i32_53 : i32
    scf.if %194 {
      %cst_54 = arith.constant dense<0.000000e+00> : vector<16x32xf32>
      %195 = tpu.matmul %189, %4, %cst_54 {dimension_numbers = #tpu.dot_dimension_numbers<[1], [0], [0], [1], [0, 0, 1, 1], [], []>} : vector<16x32xf32>, vector<32x32xf32>, vector<16x32xf32> -> vector<16x32xf32>
      %196 = arith.negf %195 : vector<16x32xf32>
      %197 = math.exp %196 : vector<16x32xf32>
      %cst_55 = arith.constant 1.000000e+00 : f32
      %198 = vector.broadcast %cst_55 : f32 to vector<16x32xf32>
      %199 = arith.addf %198, %197 : vector<16x32xf32>
      %200 = arith.divf %198, %199 : vector<16x32xf32>
      %c0_56 = arith.constant 0 : index
      %c0_57 = arith.constant 0 : index
      %201 = vector.load %arg6[%c0_56, %c0_57] : memref<16x32xf32, #tpu.memory_space<vmem>>, vector<16x32xf32>
      tpu.vector_store %arg6[%c0_56, %c0_57], %200 {strides = array<i32>} : memref<16x32xf32, #tpu.memory_space<vmem>>, vector<16x32xf32>,
    } else {
    }
    return
  }
  func.func @transform_0(%arg0: i32) -> (i32, i32) {
    %c0_i32 = arith.constant 0 : i32
    %c0_i32_0 = arith.constant 0 : i32
    return %arg0, %c0_i32 : i32, i32
  }
  func.func @transform_1(%arg0: i32) -> (i32, i32) {
    %c0_i32 = arith.constant 0 : i32
    %c0_i32_0 = arith.constant 0 : i32
    %c0_i32_1 = arith.constant 0 : i32
    return %c0_i32, %c0_i32_0 : i32, i32
  }
  func.func @transform_2(%arg0: i32) -> (i32, i32) {
    %c0_i32 = arith.constant 0 : i32
    %c0_i32_0 = arith.constant 0 : i32
    %c0_i32_1 = arith.constant 0 : i32
    return %c0_i32, %c0_i32_0 : i32, i32
  }
  func.func @transform_3(%arg0: i32) -> (i32, i32) {
    %c0_i32 = arith.constant 0 : i32
    %c0_i32_0 = arith.constant 0 : i32
    %c0_i32_1 = arith.constant 0 : i32
    return %c0_i32, %c0_i32_0 : i32, i32
  }
  func.func @transform_4(%arg0: i32) -> (i32, i32) {
    %c0_i32 = arith.constant 0 : i32
    %c0_i32_0 = arith.constant 0 : i32
    %c0_i32_1 = arith.constant 0 : i32
    return %c0_i32, %c0_i32_0 : i32, i32
  }
  func.func @transform_5(%arg0: i32) -> (i32, i32) {
    %c0_i32 = arith.constant 0 : i32
    %c0_i32_0 = arith.constant 0 : i32
    %c0_i32_1 = arith.constant 0 : i32
    return %c0_i32, %c0_i32_0 : i32, i32
  }
  func.func @transform_6(%arg0: i32) -> (i32, i32) {
    %c0_i32 = arith.constant 0 : i32
    %c0_i32_0 = arith.constant 0 : i32
    %c0_i32_1 = arith.constant 0 : i32
    return %c0_i32, %c0_i32_0 : i32, i32
  }
  func.func @transform_7(%arg0: i32) -> (i32, i32) {
    %c0_i32 = arith.constant 0 : i32
    %c0_i32_0 = arith.constant 0 : i32
    %c0_i32_1 = arith.constant 0 : i32
    return %c0_i32, %c0_i32_0 : i32, i32
  }
}

</mosaic_0001>

<llo_original>
// kernel: tpu_custom_call.1
$region0: #{tpu_custom_call.1}
  #allocation0 [shape = 'u32[]', space=smem, size = 0x4, offset = 0x4, fixed_abs, tag = 'smem constant byte address 0x4 - core index']
  #allocation1 [shape = 'u32[144,128]{1,0:T(1,128)}', space=vmem, size = 0x12000, scoped, tag = 'internal scratch']
  #allocation2 [shape = 'f32[128,128]{1,0:T(8,128)}', space=vmem, size = 0x10000, scoped, tag = 'scratch operand']
  %s0 = inlined_call_operand.vmem [shape: f32[128,32], index: 0, kind: input, shape index: {}]
  %s1 = inlined_call_operand.vmem [shape: f32[32,128], index: 1, kind: input, shape index: {}]
  %s2 = inlined_call_operand.vmem [shape: f32[32,128], index: 2, kind: input, shape index: {}]
  %s3 = inlined_call_operand.vmem [shape: f32[1,128], index: 3, kind: input, shape index: {}]
  %s4 = inlined_call_operand.vmem [shape: f32[32,32], index: 4, kind: input, shape index: {}]
  %s5 = inlined_call_operand.hbm [shape: f32[16,32], index: 5, kind: output, shape index: {0}]
  %s6 = inlined_call_operand.hbm [shape: f32[16,32], index: 6, kind: output, shape index: {1}]
  %s7 = inlined_call_operand.hbm [shape: f32[16,32], index: 7, kind: output, shape index: {2}]
  %8 = xla_tuple %s5, %s6, %s7
  %s9 = sld [smem:[#allocation0]]
  $region54: #{tpu_custom_call.1} parent=0
    _
  %s11 = ssub.s32 1, %s9
  %s12 = scalar_select 0, %s11, %s9
  $region1: #{tpu_custom_call.1} parent=0
    #allocation3 [shape = 'u8[8192]{0}', space=vmem, size = 0x2000, scoped, tag = 'output window, operand 0, single buffered']
    #allocation4 [shape = 's32[1]{0}', space=sflag, size = 0x4, scoped, tag = 'scoped memory for tpu_custom_call.1']
    #allocation5 [shape = 'u8[8192]{0}', space=vmem, size = 0x2000, scoped, tag = 'output window, operand 1, single buffered']
    #allocation6 [shape = 's32[1]{0}', space=sflag, size = 0x4, scoped, tag = 'scoped memory for tpu_custom_call.1']
    #allocation7 [shape = 'u8[8192]{0}', space=vmem, size = 0x2000, scoped, tag = 'output window, operand 2, single buffered']
    %13 = vsyncpa [#allocation4], 0
    %14 = vsyncpa [#allocation6], 0
    // Predicated region
    $region2: #{tpu_custom_call.1} parent=1 // pred_check
      _
    $region3: #{tpu_custom_call.1} parent=1 // pred_check_branch
      %16 = sbr.rel (0) target = $region5
    $region4: #{tpu_custom_call.1} parent=1 // pred_region
      _
    $region5: #{tpu_custom_call.1} parent=1 // pred_fallthru
      _
    // Predicated region
    $region6: #{tpu_custom_call.1} parent=1 // pred_check
      _
    $region7: #{tpu_custom_call.1} parent=1 // pred_check_branch
      %18 = sbr.rel (0) target = $region9
    $region8: #{tpu_custom_call.1} parent=1 // pred_region
      _
    $region9: #{tpu_custom_call.1} parent=1 // pred_fallthru
      _
    // Predicated region
    $region10: #{tpu_custom_call.1} parent=1 // pred_check
      _
    $region11: #{tpu_custom_call.1} parent=1 // pred_check_branch
      %20 = sbr.rel (0) target = $region13
    $region12: #{tpu_custom_call.1} parent=1 // pred_region
      _
    $region13: #{tpu_custom_call.1} parent=1 // pred_fallthru
      _
    // Predicated region
    $region14: #{tpu_custom_call.1} parent=1 // pred_check
      _
    $region15: #{tpu_custom_call.1} parent=1 // pred_check_branch
      %22 = sbr.rel (0) target = $region17
    $region16: #{tpu_custom_call.1} parent=1 // pred_region
      _
    $region17: #{tpu_custom_call.1} parent=1 // pred_fallthru
      _
    // Predicated region
    $region18: #{tpu_custom_call.1} parent=1 // pred_check
      _
    $region19: #{tpu_custom_call.1} parent=1 // pred_check_branch
      %24 = sbr.rel (0) target = $region21
    $region20: #{tpu_custom_call.1} parent=1 // pred_region
      _
    $region21: #{tpu_custom_call.1} parent=1 // pred_fallthru
      _
    %p25 = scmp.eq.s32.totalorder 0, 0
    // Predicated region
    $region22: #{tpu_custom_call.1} parent=1 // pred_check
      %p26 = pneg %p25
    $region23: #{tpu_custom_call.1} parent=1 // pred_check_branch
      %28 = sbr.rel (%p26) target = $region25
    $region24: #{tpu_custom_call.1} parent=1 // pred_region
      %vm29 = vcmask 261120
      %30 = vst.msk [vmem:[#allocation5] sm:$0xff] %vm29, 0.0
      %31 = vst.msk [vmem:[#allocation5 + $0x8] sm:$0xff] %vm29, 0.0
      %32 = vst.msk [vmem:[#allocation7] sm:$0xff] %vm29, 0.0
      %33 = vst.msk [vmem:[#allocation7 + $0x8] sm:$0xff] %vm29, 0.0
      %34 = vst.msk [vmem:[#allocation3] sm:$0xff] %vm29, 0.0
      %35 = vst.msk [vmem:[#allocation3 + $0x8] sm:$0xff] %vm29, 0.0
    $region25: #{tpu_custom_call.1} parent=1 // pred_fallthru
      _
    %v36 = vld [vmem:[%s2] sm:$0xff]
    %v37 = vld [vmem:[%s2 + $0x8] sm:$0xff]
    %v38 = vld [vmem:[%s2 + $0x10] sm:$0xff]
    %v39 = vld [vmem:[%s2 + $0x18] sm:$0xff]
    %v40 = vld [vmem:[%s4] sm:$0xff]
    %v41 = vld [vmem:[%s4 + $0x8] sm:$0xff]
    %v42 = vld [vmem:[%s4 + $0x10] sm:$0xff]
    %v43 = vld [vmem:[%s4 + $0x18] sm:$0xff]
    %v44 = vld [vmem:[%s0] sm:$0xff]
    %v45 = vld [vmem:[%s0 + $0x8] sm:$0xff]
    %v46 = vld [vmem:[%s0 + $0x10] sm:$0xff]
    %v47 = vld [vmem:[%s0 + $0x18] sm:$0xff]
    %v48 = vld [vmem:[%s0 + $0x20] sm:$0xff]
    %v49 = vld [vmem:[%s0 + $0x28] sm:$0xff]
    %v50 = vld [vmem:[%s0 + $0x30] sm:$0xff]
    %v51 = vld [vmem:[%s0 + $0x38] sm:$0xff]
    %v52 = vld [vmem:[%s0 + $0x40] sm:$0xff]
    %v53 = vld [vmem:[%s0 + $0x48] sm:$0xff]
    %v54 = vld [vmem:[%s0 + $0x50] sm:$0xff]
    %v55 = vld [vmem:[%s0 + $0x58] sm:$0xff]
    %v56 = vld [vmem:[%s0 + $0x60] sm:$0xff]
    %v57 = vld [vmem:[%s0 + $0x68] sm:$0xff]
    %v58 = vld [vmem:[%s0 + $0x70] sm:$0xff]
    %v59 = vld [vmem:[%s0 + $0x78] sm:$0xff]
    %v60 = vld [vmem:[%s1] sm:$0xff]
    %v61 = vld [vmem:[%s1 + $0x8] sm:$0xff]
    %v62 = vld [vmem:[%s1 + $0x10] sm:$0xff]
    %v63 = vld [vmem:[%s1 + $0x18] sm:$0xff]
    %v64 = vld [vmem:[%s3] sm:$0x1]
    %v66 = vlaneseq
    %v67 = vshrl.u32 %v66, 7
    %v68 = vsub.s32 0, %v67
    %v69 = vrot.slane %v64, %v68
    %vm71 = vcmask 261120
    %v73 = vsel %vm71, %v44, 0
    %v76 = vsel %vm71, %v45, 0
    %v79 = vsel %vm71, %v46, 0
    %v82 = vsel %vm71, %v47, 0
    %v85 = vsel %vm71, %v48, 0
    %v88 = vsel %vm71, %v49, 0
    %v91 = vsel %vm71, %v50, 0
    %v94 = vsel %vm71, %v51, 0
    %v97 = vsel %vm71, %v52, 0
    %v100 = vsel %vm71, %v53, 0
    %v103 = vsel %vm71, %v54, 0
    %v106 = vsel %vm71, %v55, 0
    %v109 = vsel %vm71, %v56, 0
    %v112 = vsel %vm71, %v57, 0
    %v115 = vsel %vm71, %v58, 0
    %v118 = vsel %vm71, %v59, 0
    %120 = vmatprep.subr.mxu0 0.0
    %121 = vmatpush1.msra.mxu0 0.0
    %122 = vmatprep.subr.mxu0 0.0
    %123 = vmatpush1.msra.mxu0 0.0
    %124 = vmatprep.subr.mxu0 0.0
    %125 = vmatpush1.msra.mxu0 0.0
    %126 = vmatprep.subr.mxu0 0.0
    %127 = vmatpush1.msra.mxu0 0.0
    %128 = vmatprep.subr.mxu0 0.0
    %129 = vmatpush1.msra.mxu0 0.0
    %130 = vmatprep.subr.mxu0 0.0
    %131 = vmatpush1.msra.mxu0 0.0
    %132 = vmatprep.subr.mxu0 0.0
    %133 = vmatpush1.msra.mxu0 0.0
    %134 = vmatprep.subr.mxu0 0.0
    %135 = vmatpush1.msra.mxu0 0.0
    %136 = vmatprep.subr.mxu0 0.0
    %137 = vmatpush1.msra.mxu0 0.0
    %138 = vmatprep.subr.mxu0 0.0
    %139 = vmatpush1.msra.mxu0 0.0
    %140 = vmatprep.subr.mxu0 0.0
    %141 = vmatpush1.msra.mxu0 0.0
    %142 = vmatprep.subr.mxu0 0.0
    %143 = vmatpush1.msra.mxu0 0.0
    %144 = vmatprep.subr.mxu0 0.0
    %145 = vmatpush1.msra.mxu0 %v63
    %146 = vmatprep.subr.mxu0 0.0
    %147 = vmatpush1.msra.mxu0 %v62
    %148 = vmatprep.subr.mxu0 0.0
    %149 = vmatpush1.msra.mxu0 %v61
    %150 = vmatprep.subr.mxu0 0.0
    %151 = vmatpush1.msra.mxu0 %v60
    %152 = vmatprep.subr.mxu0 0.0
    %153 = vmatpush2.msra.mxu0 0.0
    %154 = vmatprep.subr.mxu0 0.0
    %155 = vmatpush2.msra.mxu0 0.0
    %156 = vmatprep.subr.mxu0 0.0
    %157 = vmatpush2.msra.mxu0 0.0
    %158 = vmatprep.subr.mxu0 0.0
    %159 = vmatpush2.msra.mxu0 0.0
    %160 = vmatprep.subr.mxu0 0.0
    %161 = vmatpush2.msra.mxu0 0.0
    %162 = vmatprep.subr.mxu0 0.0
    %163 = vmatpush2.msra.mxu0 0.0
    %164 = vmatprep.subr.mxu0 0.0
    %165 = vmatpush2.msra.mxu0 0.0
    %166 = vmatprep.subr.mxu0 0.0
    %167 = vmatpush2.msra.mxu0 0.0
    %168 = vmatprep.subr.mxu0 0.0
    %169 = vmatpush2.msra.mxu0 0.0
    %170 = vmatprep.subr.mxu0 0.0
    %171 = vmatpush2.msra.mxu0 0.0
    %172 = vmatprep.subr.mxu0 0.0
    %173 = vmatpush2.msra.mxu0 0.0
    %174 = vmatprep.subr.mxu0 0.0
    %175 = vmatpush2.msra.mxu0 0.0
    %176 = vmatprep.subr.mxu0 0.0
    %177 = vmatpush2.msra.mxu0 0.0
    %178 = vmatprep.subr.mxu0 0.0
    %179 = vmatpush2.msra.mxu0 0.0
    %180 = vmatprep.subr.mxu0 0.0
    %181 = vmatpush2.msra.mxu0 0.0
    %182 = vmatprep.subr.mxu0 0.0
    %183 = vmatpush2.msra.mxu0 0.0
    %184 = vmatprep.mubr.f32.mxu0 0.0
    %185 = vmatmul.mubr.f32.gmra.mxu0 %v73
    %v186 = vpop.f32.mrf.mxu0
    %v187 = vadd.f32 %v69, %v186
    %v188 = vpop.f32.mrf.mxu0
    %189 = vmatprep.mubr.f32.mxu0 0.0
    %190 = vmatmul.mubr.f32.gmra.mxu0 %v76
    %v191 = vpop.f32.mrf.mxu0
    %v192 = vadd.f32 %v69, %v191
    %v193 = vpop.f32.mrf.mxu0
    %194 = vmatprep.mubr.f32.mxu0 0.0
    %195 = vmatmul.mubr.f32.gmra.mxu0 %v79
    %v196 = vpop.f32.mrf.mxu0
    %v197 = vadd.f32 %v69, %v196
    %v198 = vpop.f32.mrf.mxu0
    %199 = vmatprep.mubr.f32.mxu0 0.0
    %200 = vmatmul.mubr.f32.gmra.mxu0 %v82
    %v201 = vpop.f32.mrf.mxu0
    %v202 = vadd.f32 %v69, %v201
    %v203 = vpop.f32.mrf.mxu0
    %204 = vmatprep.mubr.f32.mxu0 0.0
    %205 = vmatmul.mubr.f32.gmra.mxu0 %v85
    %v206 = vpop.f32.mrf.mxu0
    %v207 = vadd.f32 %v69, %v206
    %v208 = vpop.f32.mrf.mxu0
    %209 = vmatprep.mubr.f32.mxu0 0.0
    %210 = vmatmul.mubr.f32.gmra.mxu0 %v88
    %v211 = vpop.f32.mrf.mxu0
    %v212 = vadd.f32 %v69, %v211
    %v213 = vpop.f32.mrf.mxu0
    %214 = vmatprep.mubr.f32.mxu0 0.0
    %215 = vmatmul.mubr.f32.gmra.mxu0 %v91
    %v216 = vpop.f32.mrf.mxu0
    %v217 = vadd.f32 %v69, %v216
    %v218 = vpop.f32.mrf.mxu0
    %219 = vmatprep.mubr.f32.mxu0 0.0
    %220 = vmatmul.mubr.f32.gmra.mxu0 %v94
    %v221 = vpop.f32.mrf.mxu0
    %v222 = vadd.f32 %v69, %v221
    %v223 = vpop.f32.mrf.mxu0
    %224 = vmatprep.mubr.f32.mxu0 0.0
    %225 = vmatmul.mubr.f32.gmra.mxu0 %v97
    %v226 = vpop.f32.mrf.mxu0
    %v227 = vadd.f32 %v69, %v226
    %v228 = vpop.f32.mrf.mxu0
    %229 = vmatprep.mubr.f32.mxu0 0.0
    %230 = vmatmul.mubr.f32.gmra.mxu0 %v100
    %v231 = vpop.f32.mrf.mxu0
    %v232 = vadd.f32 %v69, %v231
    %v233 = vpop.f32.mrf.mxu0
    %234 = vmatprep.mubr.f32.mxu0 0.0
    %235 = vmatmul.mubr.f32.gmra.mxu0 %v103
    %v236 = vpop.f32.mrf.mxu0
    %v237 = vadd.f32 %v69, %v236
    %v238 = vpop.f32.mrf.mxu0
    %239 = vmatprep.mubr.f32.mxu0 0.0
    %240 = vmatmul.mubr.f32.gmra.mxu0 %v106
    %v241 = vpop.f32.mrf.mxu0
    %v242 = vadd.f32 %v69, %v241
    %v243 = vpop.f32.mrf.mxu0
    %244 = vmatprep.mubr.f32.mxu0 0.0
    %245 = vmatmul.mubr.f32.gmra.mxu0 %v109
    %v246 = vpop.f32.mrf.mxu0
    %v247 = vadd.f32 %v69, %v246
    %v248 = vpop.f32.mrf.mxu0
    %249 = vmatprep.mubr.f32.mxu0 0.0
    %250 = vmatmul.mubr.f32.gmra.mxu0 %v112
    %v251 = vpop.f32.mrf.mxu0
    %v252 = vadd.f32 %v69, %v251
    %v253 = vpop.f32.mrf.mxu0
    %254 = vmatprep.mubr.f32.mxu0 0.0
    %255 = vmatmul.mubr.f32.gmra.mxu0 %v115
    %v256 = vpop.f32.mrf.mxu0
    %v257 = vadd.f32 %v69, %v256
    %v258 = vpop.f32.mrf.mxu0
    %259 = vmatprep.mubr.f32.mxu0 0.0
    %260 = vmatmul.mubr.f32.gmra.mxu0 %v118
    %v261 = vpop.f32.mrf.mxu0
    %v262 = vadd.f32 %v69, %v261
    %v263 = vpop.f32.mrf.mxu0
    %264 = vdwg.mxu0
    %265 = vst [vmem:[#allocation2] sm:$0xff] %v187
    %266 = vst [vmem:[#allocation2 + $0x8] sm:$0xff] %v192
    %267 = vst [vmem:[#allocation2 + $0x10] sm:$0xff] %v197
    %268 = vst [vmem:[#allocation2 + $0x18] sm:$0xff] %v202
    %269 = vst [vmem:[#allocation2 + $0x20] sm:$0xff] %v207
    %270 = vst [vmem:[#allocation2 + $0x28] sm:$0xff] %v212
    %271 = vst [vmem:[#allocation2 + $0x30] sm:$0xff] %v217
    %272 = vst [vmem:[#allocation2 + $0x38] sm:$0xff] %v222
    %273 = vst [vmem:[#allocation2 + $0x40] sm:$0xff] %v227
    %274 = vst [vmem:[#allocation2 + $0x48] sm:$0xff] %v232
    %275 = vst [vmem:[#allocation2 + $0x50] sm:$0xff] %v237
    %276 = vst [vmem:[#allocation2 + $0x58] sm:$0xff] %v242
    %277 = vst [vmem:[#allocation2 + $0x60] sm:$0xff] %v247
    %278 = vst [vmem:[#allocation2 + $0x68] sm:$0xff] %v252
    %279 = vst [vmem:[#allocation2 + $0x70] sm:$0xff] %v257
    %280 = vst [vmem:[#allocation2 + $0x78] sm:$0xff] %v262
    %v281 = vld [vmem:[#allocation5] sm:$0xff]
    %v282 = vld [vmem:[#allocation5 + $0x8] sm:$0xff]
    %v283 = vld [vmem:[#allocation7] sm:$0xff]
    %v284 = vld [vmem:[#allocation7 + $0x8] sm:$0xff]
    %v285 = vld [vmem:[#allocation2] sm:$0xff]
    %v286 = vld [vmem:[#allocation2 + $0x8] sm:$0xff]
    %v288 = vsel %vm71, %v281, 0
    %v291 = vsel %vm71, %v282, 0
    %293 = vmatprep.subr.mxu0 0.0
    %294 = vmatpush1.msra.mxu0 0.0
    %295 = vmatprep.subr.mxu0 0.0
    %296 = vmatpush1.msra.mxu0 0.0
    %297 = vmatprep.subr.mxu0 0.0
    %298 = vmatpush1.msra.mxu0 0.0
    %299 = vmatprep.subr.mxu0 0.0
    %300 = vmatpush1.msra.mxu0 0.0
    %301 = vmatprep.subr.mxu0 0.0
    %302 = vmatpush1.msra.mxu0 0.0
    %303 = vmatprep.subr.mxu0 0.0
    %304 = vmatpush1.msra.mxu0 0.0
    %305 = vmatprep.subr.mxu0 0.0
    %306 = vmatpush1.msra.mxu0 0.0
    %307 = vmatprep.subr.mxu0 0.0
    %308 = vmatpush1.msra.mxu0 0.0
    %309 = vmatprep.subr.mxu0 0.0
    %310 = vmatpush1.msra.mxu0 0.0
    %311 = vmatprep.subr.mxu0 0.0
    %312 = vmatpush1.msra.mxu0 0.0
    %313 = vmatprep.subr.mxu0 0.0
    %314 = vmatpush1.msra.mxu0 0.0
    %315 = vmatprep.subr.mxu0 0.0
    %316 = vmatpush1.msra.mxu0 0.0
    %317 = vmatprep.subr.mxu0 0.0
    %318 = vmatpush1.msra.mxu0 %v39
    %319 = vmatprep.subr.mxu0 0.0
    %320 = vmatpush1.msra.mxu0 %v38
    %321 = vmatprep.subr.mxu0 0.0
    %322 = vmatpush1.msra.mxu0 %v37
    %323 = vmatprep.subr.mxu0 0.0
    %324 = vmatpush1.msra.mxu0 %v36
    %325 = vmatprep.subr.mxu0 0.0
    %326 = vmatpush2.msra.mxu0 0.0
    %327 = vmatprep.subr.mxu0 0.0
    %328 = vmatpush2.msra.mxu0 0.0
    %329 = vmatprep.subr.mxu0 0.0
    %330 = vmatpush2.msra.mxu0 0.0
    %331 = vmatprep.subr.mxu0 0.0
    %332 = vmatpush2.msra.mxu0 0.0
    %333 = vmatprep.subr.mxu0 0.0
    %334 = vmatpush2.msra.mxu0 0.0
    %335 = vmatprep.subr.mxu0 0.0
    %336 = vmatpush2.msra.mxu0 0.0
    %337 = vmatprep.subr.mxu0 0.0
    %338 = vmatpush2.msra.mxu0 0.0
    %339 = vmatprep.subr.mxu0 0.0
    %340 = vmatpush2.msra.mxu0 0.0
    %341 = vmatprep.subr.mxu0 0.0
    %342 = vmatpush2.msra.mxu0 0.0
    %343 = vmatprep.subr.mxu0 0.0
    %344 = vmatpush2.msra.mxu0 0.0
    %345 = vmatprep.subr.mxu0 0.0
    %346 = vmatpush2.msra.mxu0 0.0
    %347 = vmatprep.subr.mxu0 0.0
    %348 = vmatpush2.msra.mxu0 0.0
    %349 = vmatprep.subr.mxu0 0.0
    %350 = vmatpush2.msra.mxu0 0.0
    %351 = vmatprep.subr.mxu0 0.0
    %352 = vmatpush2.msra.mxu0 0.0
    %353 = vmatprep.subr.mxu0 0.0
    %354 = vmatpush2.msra.mxu0 0.0
    %355 = vmatprep.subr.mxu0 0.0
    %356 = vmatpush2.msra.mxu0 0.0
    %357 = vmatprep.mubr.f32.mxu0 0.0
    %358 = vmatmul.mubr.f32.gmra.mxu0 %v288
    %v359 = vpop.f32.mrf.mxu0
    %v360 = vadd.f32 0.0, %v359
    %v361 = vpop.f32.mrf.mxu0
    %362 = vmatprep.mubr.f32.mxu0 0.0
    %363 = vmatmul.mubr.f32.gmra.mxu0 %v291
    %v364 = vpop.f32.mrf.mxu0
    %v365 = vadd.f32 0.0, %v364
    %v366 = vpop.f32.mrf.mxu0
    %367 = vdwg.mxu0
    %v368 = vadd.f32 %v285, %v360
    %v369 = vadd.f32 %v286, %v365
    %v370 = vxor.u32 %v368, 2147483648
    %v371 = vxor.u32 %v369, 2147483648
    %v372 = vmul.f32 %v370, 1.442695
    %v373 = vpow.pop %v372
    %v374 = vmul.f32 %v371, 1.442695
    %v375 = vpow.pop %v374
    %v376 = vadd.f32 %v373, 1.0
    %v377 = vadd.f32 %v375, 1.0
    %v378 = vrcp.pop %v376
    %v379 = vmul.f32 1.0, %v378
    %v380 = vrcp.pop %v377
    %v381 = vmul.f32 1.0, %v380
    %v382 = vtanh.pop %v368
    %v383 = vtanh.pop %v369
    %386 = vrot.lane.b32.xlu0 %v283, 32
    %v387 = vpop.permute.xlu0 %386
    %388 = vrot.lane.b32.xlu0 %v284, 32
    %v389 = vpop.permute.xlu0 %388
    %v392 = vmul.f32 %v379, %v387
    %v393 = vmul.f32 %v381, %v389
    %396 = vrot.lane.b32.xlu0 %v382, 32
    %v397 = vpop.permute.xlu0 %396
    %398 = vrot.lane.b32.xlu0 %v383, 32
    %v399 = vpop.permute.xlu0 %398
    %v402 = vmul.f32 %v379, %v397
    %v403 = vmul.f32 %v381, %v399
    %406 = vrot.lane.b32.xlu0 %v402, 32
    %v407 = vpop.permute.xlu0 %406
    %408 = vrot.lane.b32.xlu0 %v403, 32
    %v409 = vpop.permute.xlu0 %408
    %v412 = vadd.f32 %v392, %v407
    %v413 = vadd.f32 %v393, %v409
    %v414 = vtanh.pop %v412
    %v415 = vtanh.pop %v413
    %418 = vrot.lane.b32.xlu0 %v414, 32
    %v419 = vpop.permute.xlu0 %418
    %420 = vrot.lane.b32.xlu0 %v415, 32
    %v421 = vpop.permute.xlu0 %420
    %v424 = vmul.f32 %v379, %v419
    %v425 = vmul.f32 %v381, %v421
    %s426 = scalar_lea.vmem [#allocation2], 16
    %v427 = vld [vmem:[%s426] sm:$0xff]
    %v428 = vld [vmem:[%s426 + $0x8] sm:$0xff]
    %431 = vrot.lane.b32.xlu0 %v424, 64
    %v432 = vpop.permute.xlu0 %431
    %433 = vrot.lane.b32.xlu0 %v425, 64
    %v434 = vpop.permute.xlu0 %433
    %v435 = vsel %vm71, %v432, 0
    %v437 = vsel %vm71, %v434, 0
    %439 = vmatprep.subr.mxu0 0.0
    %440 = vmatpush1.msra.mxu0 0.0
    %441 = vmatprep.subr.mxu0 0.0
    %442 = vmatpush1.msra.mxu0 0.0
    %443 = vmatprep.subr.mxu0 0.0
    %444 = vmatpush1.msra.mxu0 0.0
    %445 = vmatprep.subr.mxu0 0.0
    %446 = vmatpush1.msra.mxu0 0.0
    %447 = vmatprep.subr.mxu0 0.0
    %448 = vmatpush1.msra.mxu0 0.0
    %449 = vmatprep.subr.mxu0 0.0
    %450 = vmatpush1.msra.mxu0 0.0
    %451 = vmatprep.subr.mxu0 0.0
    %452 = vmatpush1.msra.mxu0 0.0
    %453 = vmatprep.subr.mxu0 0.0
    %454 = vmatpush1.msra.mxu0 0.0
    %455 = vmatprep.subr.mxu0 0.0
    %456 = vmatpush1.msra.mxu0 0.0
    %457 = vmatprep.subr.mxu0 0.0
    %458 = vmatpush1.msra.mxu0 0.0
    %459 = vmatprep.subr.mxu0 0.0
    %460 = vmatpush1.msra.mxu0 0.0
    %461 = vmatprep.subr.mxu0 0.0
    %462 = vmatpush1.msra.mxu0 0.0
    %463 = vmatprep.subr.mxu0 0.0
    %464 = vmatpush1.msra.mxu0 %v39
    %465 = vmatprep.subr.mxu0 0.0
    %466 = vmatpush1.msra.mxu0 %v38
    %467 = vmatprep.subr.mxu0 0.0
    %468 = vmatpush1.msra.mxu0 %v37
    %469 = vmatprep.subr.mxu0 0.0
    %470 = vmatpush1.msra.mxu0 %v36
    %471 = vmatprep.subr.mxu0 0.0
    %472 = vmatpush2.msra.mxu0 0.0
    %473 = vmatprep.subr.mxu0 0.0
    %474 = vmatpush2.msra.mxu0 0.0
    %475 = vmatprep.subr.mxu0 0.0
    %476 = vmatpush2.msra.mxu0 0.0
    %477 = vmatprep.subr.mxu0 0.0
    %478 = vmatpush2.msra.mxu0 0.0
    %479 = vmatprep.subr.mxu0 0.0
    %480 = vmatpush2.msra.mxu0 0.0
    %481 = vmatprep.subr.mxu0 0.0
    %482 = vmatpush2.msra.mxu0 0.0
    %483 = vmatprep.subr.mxu0 0.0
    %484 = vmatpush2.msra.mxu0 0.0
    %485 = vmatprep.subr.mxu0 0.0
    %486 = vmatpush2.msra.mxu0 0.0
    %487 = vmatprep.subr.mxu0 0.0
    %488 = vmatpush2.msra.mxu0 0.0
    %489 = vmatprep.subr.mxu0 0.0
    %490 = vmatpush2.msra.mxu0 0.0
    %491 = vmatprep.subr.mxu0 0.0
    %492 = vmatpush2.msra.mxu0 0.0
    %493 = vmatprep.subr.mxu0 0.0
    %494 = vmatpush2.msra.mxu0 0.0
    %495 = vmatprep.subr.mxu0 0.0
    %496 = vmatpush2.msra.mxu0 0.0
    %497 = vmatprep.subr.mxu0 0.0
    %498 = vmatpush2.msra.mxu0 0.0
    %499 = vmatprep.subr.mxu0 0.0
    %500 = vmatpush2.msra.mxu0 0.0
    %501 = vmatprep.subr.mxu0 0.0
    %502 = vmatpush2.msra.mxu0 0.0
    %503 = vmatprep.mubr.f32.mxu0 0.0
    %504 = vmatmul.mubr.f32.gmra.mxu0 %v435
    %v505 = vpop.f32.mrf.mxu0
    %v506 = vadd.f32 0.0, %v505
    %v507 = vpop.f32.mrf.mxu0
    %508 = vmatprep.mubr.f32.mxu0 0.0
    %509 = vmatmul.mubr.f32.gmra.mxu0 %v437
    %v510 = vpop.f32.mrf.mxu0
    %v511 = vadd.f32 0.0, %v510
    %v512 = vpop.f32.mrf.mxu0
    %513 = vdwg.mxu0
    %v514 = vadd.f32 %v427, %v506
    %v515 = vadd.f32 %v428, %v511
    %v516 = vxor.u32 %v514, 2147483648
    %v517 = vxor.u32 %v515, 2147483648
    %v518 = vmul.f32 %v516, 1.442695
    %v519 = vpow.pop %v518
    %v520 = vmul.f32 %v517, 1.442695
    %v521 = vpow.pop %v520
    %v522 = vadd.f32 %v519, 1.0
    %v523 = vadd.f32 %v521, 1.0
    %v524 = vrcp.pop %v522
    %v525 = vmul.f32 1.0, %v524
    %v526 = vrcp.pop %v523
    %v527 = vmul.f32 1.0, %v526
    %v528 = vtanh.pop %v514
    %v529 = vtanh.pop %v515
    %v530 = vmul.f32 %v525, %v412
    %v531 = vmul.f32 %v527, %v413
    %534 = vrot.lane.b32.xlu0 %v528, 32
    %v535 = vpop.permute.xlu0 %534
    %536 = vrot.lane.b32.xlu0 %v529, 32
    %v537 = vpop.permute.xlu0 %536
    %v540 = vmul.f32 %v525, %v535
    %v541 = vmul.f32 %v527, %v537
    %544 = vrot.lane.b32.xlu0 %v540, 32
    %v545 = vpop.permute.xlu0 %544
    %546 = vrot.lane.b32.xlu0 %v541, 32
    %v547 = vpop.permute.xlu0 %546
    %v550 = vadd.f32 %v530, %v545
    %v551 = vadd.f32 %v531, %v547
    %v552 = vtanh.pop %v550
    %v553 = vtanh.pop %v551
    %556 = vrot.lane.b32.xlu0 %v552, 32
    %v557 = vpop.permute.xlu0 %556
    %558 = vrot.lane.b32.xlu0 %v553, 32
    %v559 = vpop.permute.xlu0 %558
    %v562 = vmul.f32 %v525, %v557
    %v563 = vmul.f32 %v527, %v559
    %s564 = scalar_lea.vmem [#allocation2], 32
    %v565 = vld [vmem:[%s564] sm:$0xff]
    %v566 = vld [vmem:[%s564 + $0x8] sm:$0xff]
    %569 = vrot.lane.b32.xlu0 %v562, 64
    %v570 = vpop.permute.xlu0 %569
    %571 = vrot.lane.b32.xlu0 %v563, 64
    %v572 = vpop.permute.xlu0 %571
    %v573 = vsel %vm71, %v570, 0
    %v575 = vsel %vm71, %v572, 0
    %577 = vmatprep.subr.mxu0 0.0
    %578 = vmatpush1.msra.mxu0 0.0
    %579 = vmatprep.subr.mxu0 0.0
    %580 = vmatpush1.msra.mxu0 0.0
    %581 = vmatprep.subr.mxu0 0.0
    %582 = vmatpush1.msra.mxu0 0.0
    %583 = vmatprep.subr.mxu0 0.0
    %584 = vmatpush1.msra.mxu0 0.0
    %585 = vmatprep.subr.mxu0 0.0
    %586 = vmatpush1.msra.mxu0 0.0
    %587 = vmatprep.subr.mxu0 0.0
    %588 = vmatpush1.msra.mxu0 0.0
    %589 = vmatprep.subr.mxu0 0.0
    %590 = vmatpush1.msra.mxu0 0.0
    %591 = vmatprep.subr.mxu0 0.0
    %592 = vmatpush1.msra.mxu0 0.0
    %593 = vmatprep.subr.mxu0 0.0
    %594 = vmatpush1.msra.mxu0 0.0
    %595 = vmatprep.subr.mxu0 0.0
    %596 = vmatpush1.msra.mxu0 0.0
    %597 = vmatprep.subr.mxu0 0.0
    %598 = vmatpush1.msra.mxu0 0.0
    %599 = vmatprep.subr.mxu0 0.0
    %600 = vmatpush1.msra.mxu0 0.0
    %601 = vmatprep.subr.mxu0 0.0
    %602 = vmatpush1.msra.mxu0 %v39
    %603 = vmatprep.subr.mxu0 0.0
    %604 = vmatpush1.msra.mxu0 %v38
    %605 = vmatprep.subr.mxu0 0.0
    %606 = vmatpush1.msra.mxu0 %v37
    %607 = vmatprep.subr.mxu0 0.0
    %608 = vmatpush1.msra.mxu0 %v36
    %609 = vmatprep.subr.mxu0 0.0
    %610 = vmatpush2.msra.mxu0 0.0
    %611 = vmatprep.subr.mxu0 0.0
    %612 = vmatpush2.msra.mxu0 0.0
    %613 = vmatprep.subr.mxu0 0.0
    %614 = vmatpush2.msra.mxu0 0.0
    %615 = vmatprep.subr.mxu0 0.0
    %616 = vmatpush2.msra.mxu0 0.0
    %617 = vmatprep.subr.mxu0 0.0
    %618 = vmatpush2.msra.mxu0 0.0
    %619 = vmatprep.subr.mxu0 0.0
    %620 = vmatpush2.msra.mxu0 0.0
    %621 = vmatprep.subr.mxu0 0.0
    %622 = vmatpush2.msra.mxu0 0.0
    %623 = vmatprep.subr.mxu0 0.0
    %624 = vmatpush2.msra.mxu0 0.0
    %625 = vmatprep.subr.mxu0 0.0
    %626 = vmatpush2.msra.mxu0 0.0
    %627 = vmatprep.subr.mxu0 0.0
    %628 = vmatpush2.msra.mxu0 0.0
    %629 = vmatprep.subr.mxu0 0.0
    %630 = vmatpush2.msra.mxu0 0.0
    %631 = vmatprep.subr.mxu0 0.0
    %632 = vmatpush2.msra.mxu0 0.0
    %633 = vmatprep.subr.mxu0 0.0
    %634 = vmatpush2.msra.mxu0 0.0
    %635 = vmatprep.subr.mxu0 0.0
    %636 = vmatpush2.msra.mxu0 0.0
    %637 = vmatprep.subr.mxu0 0.0
    %638 = vmatpush2.msra.mxu0 0.0
    %639 = vmatprep.subr.mxu0 0.0
    %640 = vmatpush2.msra.mxu0 0.0
    %641 = vmatprep.mubr.f32.mxu0 0.0
    %642 = vmatmul.mubr.f32.gmra.mxu0 %v573
    %v643 = vpop.f32.mrf.mxu0
    %v644 = vadd.f32 0.0, %v643
    %v645 = vpop.f32.mrf.mxu0
    %646 = vmatprep.mubr.f32.mxu0 0.0
    %647 = vmatmul.mubr.f32.gmra.mxu0 %v575
    %v648 = vpop.f32.mrf.mxu0
    %v649 = vadd.f32 0.0, %v648
    %v650 = vpop.f32.mrf.mxu0
    %651 = vdwg.mxu0
    %v652 = vadd.f32 %v565, %v644
    %v653 = vadd.f32 %v566, %v649
    %v654 = vxor.u32 %v652, 2147483648
    %v655 = vxor.u32 %v653, 2147483648
    %v656 = vmul.f32 %v654, 1.442695
    %v657 = vpow.pop %v656
    %v658 = vmul.f32 %v655, 1.442695
    %v659 = vpow.pop %v658
    %v660 = vadd.f32 %v657, 1.0
    %v661 = vadd.f32 %v659, 1.0
    %v662 = vrcp.pop %v660
    %v663 = vmul.f32 1.0, %v662
    %v664 = vrcp.pop %v661
    %v665 = vmul.f32 1.0, %v664
    %v666 = vtanh.pop %v652
    %v667 = vtanh.pop %v653
    %v668 = vmul.f32 %v663, %v550
    %v669 = vmul.f32 %v665, %v551
    %672 = vrot.lane.b32.xlu0 %v666, 32
    %v673 = vpop.permute.xlu0 %672
    %674 = vrot.lane.b32.xlu0 %v667, 32
    %v675 = vpop.permute.xlu0 %674
    %v678 = vmul.f32 %v663, %v673
    %v679 = vmul.f32 %v665, %v675
    %682 = vrot.lane.b32.xlu0 %v678, 32
    %v683 = vpop.permute.xlu0 %682
    %684 = vrot.lane.b32.xlu0 %v679, 32
    %v685 = vpop.permute.xlu0 %684
    %v688 = vadd.f32 %v668, %v683
    %v689 = vadd.f32 %v669, %v685
    %v690 = vtanh.pop %v688
    %v691 = vtanh.pop %v689
    %694 = vrot.lane.b32.xlu0 %v690, 32
    %v695 = vpop.permute.xlu0 %694
    %696 = vrot.lane.b32.xlu0 %v691, 32
    %v697 = vpop.permute.xlu0 %696
    %v700 = vmul.f32 %v663, %v695
    %v701 = vmul.f32 %v665, %v697
    %s702 = scalar_lea.vmem [#allocation2], 48
    %v703 = vld [vmem:[%s702] sm:$0xff]
    %v704 = vld [vmem:[%s702 + $0x8] sm:$0xff]
    %707 = vrot.lane.b32.xlu0 %v700, 64
    %v708 = vpop.permute.xlu0 %707
    %709 = vrot.lane.b32.xlu0 %v701, 64
    %v710 = vpop.permute.xlu0 %709
    %v711 = vsel %vm71, %v708, 0
    %v713 = vsel %vm71, %v710, 0
    %715 = vmatprep.subr.mxu0 0.0
    %716 = vmatpush1.msra.mxu0 0.0
    %717 = vmatprep.subr.mxu0 0.0
    %718 = vmatpush1.msra.mxu0 0.0
    %719 = vmatprep.subr.mxu0 0.0
    %720 = vmatpush1.msra.mxu0 0.0
    %721 = vmatprep.subr.mxu0 0.0
    %722 = vmatpush1.msra.mxu0 0.0
    %723 = vmatprep.subr.mxu0 0.0
    %724 = vmatpush1.msra.mxu0 0.0
    %725 = vmatprep.subr.mxu0 0.0
    %726 = vmatpush1.msra.mxu0 0.0
    %727 = vmatprep.subr.mxu0 0.0
    %728 = vmatpush1.msra.mxu0 0.0
    %729 = vmatprep.subr.mxu0 0.0
    %730 = vmatpush1.msra.mxu0 0.0
    %731 = vmatprep.subr.mxu0 0.0
    %732 = vmatpush1.msra.mxu0 0.0
    %733 = vmatprep.subr.mxu0 0.0
    %734 = vmatpush1.msra.mxu0 0.0
    %735 = vmatprep.subr.mxu0 0.0
    %736 = vmatpush1.msra.mxu0 0.0
    %737 = vmatprep.subr.mxu0 0.0
    %738 = vmatpush1.msra.mxu0 0.0
    %739 = vmatprep.subr.mxu0 0.0
    %740 = vmatpush1.msra.mxu0 %v39
    %741 = vmatprep.subr.mxu0 0.0
    %742 = vmatpush1.msra.mxu0 %v38
    %743 = vmatprep.subr.mxu0 0.0
    %744 = vmatpush1.msra.mxu0 %v37
    %745 = vmatprep.subr.mxu0 0.0
    %746 = vmatpush1.msra.mxu0 %v36
    %747 = vmatprep.subr.mxu0 0.0
    %748 = vmatpush2.msra.mxu0 0.0
    %749 = vmatprep.subr.mxu0 0.0
    %750 = vmatpush2.msra.mxu0 0.0
    %751 = vmatprep.subr.mxu0 0.0
    %752 = vmatpush2.msra.mxu0 0.0
    %753 = vmatprep.subr.mxu0 0.0
    %754 = vmatpush2.msra.mxu0 0.0
    %755 = vmatprep.subr.mxu0 0.0
    %756 = vmatpush2.msra.mxu0 0.0
    %757 = vmatprep.subr.mxu0 0.0
    %758 = vmatpush2.msra.mxu0 0.0
    %759 = vmatprep.subr.mxu0 0.0
    %760 = vmatpush2.msra.mxu0 0.0
    %761 = vmatprep.subr.mxu0 0.0
    %762 = vmatpush2.msra.mxu0 0.0
    %763 = vmatprep.subr.mxu0 0.0
    %764 = vmatpush2.msra.mxu0 0.0
    %765 = vmatprep.subr.mxu0 0.0
    %766 = vmatpush2.msra.mxu0 0.0
    %767 = vmatprep.subr.mxu0 0.0
    %768 = vmatpush2.msra.mxu0 0.0
    %769 = vmatprep.subr.mxu0 0.0
    %770 = vmatpush2.msra.mxu0 0.0
    %771 = vmatprep.subr.mxu0 0.0
    %772 = vmatpush2.msra.mxu0 0.0
    %773 = vmatprep.subr.mxu0 0.0
    %774 = vmatpush2.msra.mxu0 0.0
    %775 = vmatprep.subr.mxu0 0.0
    %776 = vmatpush2.msra.mxu0 0.0
    %777 = vmatprep.subr.mxu0 0.0
    %778 = vmatpush2.msra.mxu0 0.0
    %779 = vmatprep.mubr.f32.mxu0 0.0
    %780 = vmatmul.mubr.f32.gmra.mxu0 %v711
    %v781 = vpop.f32.mrf.mxu0
    %v782 = vadd.f32 0.0, %v781
    %v783 = vpop.f32.mrf.mxu0
    %784 = vmatprep.mubr.f32.mxu0 0.0
    %785 = vmatmul.mubr.f32.gmra.mxu0 %v713
    %v786 = vpop.f32.mrf.mxu0
    %v787 = vadd.f32 0.0, %v786
    %v788 = vpop.f32.mrf.mxu0
    %789 = vdwg.mxu0
    %v790 = vadd.f32 %v703, %v782
    %v791 = vadd.f32 %v704, %v787
    %v792 = vxor.u32 %v790, 2147483648
    %v793 = vxor.u32 %v791, 2147483648
    %v794 = vmul.f32 %v792, 1.442695
    %v795 = vpow.pop %v794
    %v796 = vmul.f32 %v793, 1.442695
    %v797 = vpow.pop %v796
    %v798 = vadd.f32 %v795, 1.0
    %v799 = vadd.f32 %v797, 1.0
    %v800 = vrcp.pop %v798
    %v801 = vmul.f32 1.0, %v800
    %v802 = vrcp.pop %v799
    %v803 = vmul.f32 1.0, %v802
    %v804 = vtanh.pop %v790
    %v805 = vtanh.pop %v791
    %v806 = vmul.f32 %v801, %v688
    %v807 = vmul.f32 %v803, %v689
    %810 = vrot.lane.b32.xlu0 %v804, 32
    %v811 = vpop.permute.xlu0 %810
    %812 = vrot.lane.b32.xlu0 %v805, 32
    %v813 = vpop.permute.xlu0 %812
    %v816 = vmul.f32 %v801, %v811
    %v817 = vmul.f32 %v803, %v813
    %820 = vrot.lane.b32.xlu0 %v816, 32
    %v821 = vpop.permute.xlu0 %820
    %822 = vrot.lane.b32.xlu0 %v817, 32
    %v823 = vpop.permute.xlu0 %822
    %v826 = vadd.f32 %v806, %v821
    %v827 = vadd.f32 %v807, %v823
    %v828 = vtanh.pop %v826
    %v829 = vtanh.pop %v827
    %832 = vrot.lane.b32.xlu0 %v828, 32
    %v833 = vpop.permute.xlu0 %832
    %834 = vrot.lane.b32.xlu0 %v829, 32
    %v835 = vpop.permute.xlu0 %834
    %v838 = vmul.f32 %v801, %v833
    %v839 = vmul.f32 %v803, %v835
    %s840 = scalar_lea.vmem [#allocation2], 64
    %v841 = vld [vmem:[%s840] sm:$0xff]
    %v842 = vld [vmem:[%s840 + $0x8] sm:$0xff]
    %845 = vrot.lane.b32.xlu0 %v838, 64
    %v846 = vpop.permute.xlu0 %845
    %847 = vrot.lane.b32.xlu0 %v839, 64
    %v848 = vpop.permute.xlu0 %847
    %v849 = vsel %vm71, %v846, 0
    %v851 = vsel %vm71, %v848, 0
    %853 = vmatprep.subr.mxu0 0.0
    %854 = vmatpush1.msra.mxu0 0.0
    %855 = vmatprep.subr.mxu0 0.0
    %856 = vmatpush1.msra.mxu0 0.0
    %857 = vmatprep.subr.mxu0 0.0
    %858 = vmatpush1.msra.mxu0 0.0
    %859 = vmatprep.subr.mxu0 0.0
    %860 = vmatpush1.msra.mxu0 0.0
    %861 = vmatprep.subr.mxu0 0.0
    %862 = vmatpush1.msra.mxu0 0.0
    %863 = vmatprep.subr.mxu0 0.0
    %864 = vmatpush1.msra.mxu0 0.0
    %865 = vmatprep.subr.mxu0 0.0
    %866 = vmatpush1.msra.mxu0 0.0
    %867 = vmatprep.subr.mxu0 0.0
    %868 = vmatpush1.msra.mxu0 0.0
    %869 = vmatprep.subr.mxu0 0.0
    %870 = vmatpush1.msra.mxu0 0.0
    %871 = vmatprep.subr.mxu0 0.0
    %872 = vmatpush1.msra.mxu0 0.0
    %873 = vmatprep.subr.mxu0 0.0
    %874 = vmatpush1.msra.mxu0 0.0
    %875 = vmatprep.subr.mxu0 0.0
    %876 = vmatpush1.msra.mxu0 0.0
    %877 = vmatprep.subr.mxu0 0.0
    %878 = vmatpush1.msra.mxu0 %v39
    %879 = vmatprep.subr.mxu0 0.0
    %880 = vmatpush1.msra.mxu0 %v38
    %881 = vmatprep.subr.mxu0 0.0
    %882 = vmatpush1.msra.mxu0 %v37
    %883 = vmatprep.subr.mxu0 0.0
    %884 = vmatpush1.msra.mxu0 %v36
    %885 = vmatprep.subr.mxu0 0.0
    %886 = vmatpush2.msra.mxu0 0.0
    %887 = vmatprep.subr.mxu0 0.0
    %888 = vmatpush2.msra.mxu0 0.0
    %889 = vmatprep.subr.mxu0 0.0
    %890 = vmatpush2.msra.mxu0 0.0
    %891 = vmatprep.subr.mxu0 0.0
    %892 = vmatpush2.msra.mxu0 0.0
    %893 = vmatprep.subr.mxu0 0.0
    %894 = vmatpush2.msra.mxu0 0.0
    %895 = vmatprep.subr.mxu0 0.0
    %896 = vmatpush2.msra.mxu0 0.0
    %897 = vmatprep.subr.mxu0 0.0
    %898 = vmatpush2.msra.mxu0 0.0
    %899 = vmatprep.subr.mxu0 0.0
    %900 = vmatpush2.msra.mxu0 0.0
    %901 = vmatprep.subr.mxu0 0.0
    %902 = vmatpush2.msra.mxu0 0.0
    %903 = vmatprep.subr.mxu0 0.0
    %904 = vmatpush2.msra.mxu0 0.0
    %905 = vmatprep.subr.mxu0 0.0
    %906 = vmatpush2.msra.mxu0 0.0
    %907 = vmatprep.subr.mxu0 0.0
    %908 = vmatpush2.msra.mxu0 0.0
    %909 = vmatprep.subr.mxu0 0.0
    %910 = vmatpush2.msra.mxu0 0.0
    %911 = vmatprep.subr.mxu0 0.0
    %912 = vmatpush2.msra.mxu0 0.0
    %913 = vmatprep.subr.mxu0 0.0
    %914 = vmatpush2.msra.mxu0 0.0
    %915 = vmatprep.subr.mxu0 0.0
    %916 = vmatpush2.msra.mxu0 0.0
    %917 = vmatprep.mubr.f32.mxu0 0.0
    %918 = vmatmul.mubr.f32.gmra.mxu0 %v849
    %v919 = vpop.f32.mrf.mxu0
    %v920 = vadd.f32 0.0, %v919
    %v921 = vpop.f32.mrf.mxu0
    %922 = vmatprep.mubr.f32.mxu0 0.0
    %923 = vmatmul.mubr.f32.gmra.mxu0 %v851
    %v924 = vpop.f32.mrf.mxu0
    %v925 = vadd.f32 0.0, %v924
    %v926 = vpop.f32.mrf.mxu0
    %927 = vdwg.mxu0
    %v928 = vadd.f32 %v841, %v920
    %v929 = vadd.f32 %v842, %v925
    %v930 = vxor.u32 %v928, 2147483648
    %v931 = vxor.u32 %v929, 2147483648
    %v932 = vmul.f32 %v930, 1.442695
    %v933 = vpow.pop %v932
    %v934 = vmul.f32 %v931, 1.442695
    %v935 = vpow.pop %v934
    %v936 = vadd.f32 %v933, 1.0
    %v937 = vadd.f32 %v935, 1.0
    %v938 = vrcp.pop %v936
    %v939 = vmul.f32 1.0, %v938
    %v940 = vrcp.pop %v937
    %v941 = vmul.f32 1.0, %v940
    %v942 = vtanh.pop %v928
    %v943 = vtanh.pop %v929
    %v944 = vmul.f32 %v939, %v826
    %v945 = vmul.f32 %v941, %v827
    %948 = vrot.lane.b32.xlu0 %v942, 32
    %v949 = vpop.permute.xlu0 %948
    %950 = vrot.lane.b32.xlu0 %v943, 32
    %v951 = vpop.permute.xlu0 %950
    %v954 = vmul.f32 %v939, %v949
    %v955 = vmul.f32 %v941, %v951
    %958 = vrot.lane.b32.xlu0 %v954, 32
    %v959 = vpop.permute.xlu0 %958
    %960 = vrot.lane.b32.xlu0 %v955, 32
    %v961 = vpop.permute.xlu0 %960
    %v964 = vadd.f32 %v944, %v959
    %v965 = vadd.f32 %v945, %v961
    %v966 = vtanh.pop %v964
    %v967 = vtanh.pop %v965
    %970 = vrot.lane.b32.xlu0 %v966, 32
    %v971 = vpop.permute.xlu0 %970
    %972 = vrot.lane.b32.xlu0 %v967, 32
    %v973 = vpop.permute.xlu0 %972
    %v976 = vmul.f32 %v939, %v971
    %v977 = vmul.f32 %v941, %v973
    %s978 = scalar_lea.vmem [#allocation2], 80
    %v979 = vld [vmem:[%s978] sm:$0xff]
    %v980 = vld [vmem:[%s978 + $0x8] sm:$0xff]
    %983 = vrot.lane.b32.xlu0 %v976, 64
    %v984 = vpop.permute.xlu0 %983
    %985 = vrot.lane.b32.xlu0 %v977, 64
    %v986 = vpop.permute.xlu0 %985
    %v987 = vsel %vm71, %v984, 0
    %v989 = vsel %vm71, %v986, 0
    %991 = vmatprep.subr.mxu0 0.0
    %992 = vmatpush1.msra.mxu0 0.0
    %993 = vmatprep.subr.mxu0 0.0
    %994 = vmatpush1.msra.mxu0 0.0
    %995 = vmatprep.subr.mxu0 0.0
    %996 = vmatpush1.msra.mxu0 0.0
    %997 = vmatprep.subr.mxu0 0.0
    %998 = vmatpush1.msra.mxu0 0.0
    %999 = vmatprep.subr.mxu0 0.0
    %1000 = vmatpush1.msra.mxu0 0.0
    %1001 = vmatprep.subr.mxu0 0.0
    %1002 = vmatpush1.msra.mxu0 0.0
    %1003 = vmatprep.subr.mxu0 0.0
    %1004 = vmatpush1.msra.mxu0 0.0
    %1005 = vmatprep.subr.mxu0 0.0
    %1006 = vmatpush1.msra.mxu0 0.0
    %1007 = vmatprep.subr.mxu0 0.0
    %1008 = vmatpush1.msra.mxu0 0.0
    %1009 = vmatprep.subr.mxu0 0.0
    %1010 = vmatpush1.msra.mxu0 0.0
    %1011 = vmatprep.subr.mxu0 0.0
    %1012 = vmatpush1.msra.mxu0 0.0
    %1013 = vmatprep.subr.mxu0 0.0
    %1014 = vmatpush1.msra.mxu0 0.0
    %1015 = vmatprep.subr.mxu0 0.0
    %1016 = vmatpush1.msra.mxu0 %v39
    %1017 = vmatprep.subr.mxu0 0.0
    %1018 = vmatpush1.msra.mxu0 %v38
    %1019 = vmatprep.subr.mxu0 0.0
    %1020 = vmatpush1.msra.mxu0 %v37
    %1021 = vmatprep.subr.mxu0 0.0
    %1022 = vmatpush1.msra.mxu0 %v36
    %1023 = vmatprep.subr.mxu0 0.0
    %1024 = vmatpush2.msra.mxu0 0.0
    %1025 = vmatprep.subr.mxu0 0.0
    %1026 = vmatpush2.msra.mxu0 0.0
    %1027 = vmatprep.subr.mxu0 0.0
    %1028 = vmatpush2.msra.mxu0 0.0
    %1029 = vmatprep.subr.mxu0 0.0
    %1030 = vmatpush2.msra.mxu0 0.0
    %1031 = vmatprep.subr.mxu0 0.0
    %1032 = vmatpush2.msra.mxu0 0.0
    %1033 = vmatprep.subr.mxu0 0.0
    %1034 = vmatpush2.msra.mxu0 0.0
    %1035 = vmatprep.subr.mxu0 0.0
    %1036 = vmatpush2.msra.mxu0 0.0
    %1037 = vmatprep.subr.mxu0 0.0
    %1038 = vmatpush2.msra.mxu0 0.0
    %1039 = vmatprep.subr.mxu0 0.0
    %1040 = vmatpush2.msra.mxu0 0.0
    %1041 = vmatprep.subr.mxu0 0.0
    %1042 = vmatpush2.msra.mxu0 0.0
    %1043 = vmatprep.subr.mxu0 0.0
    %1044 = vmatpush2.msra.mxu0 0.0
    %1045 = vmatprep.subr.mxu0 0.0
    %1046 = vmatpush2.msra.mxu0 0.0
    %1047 = vmatprep.subr.mxu0 0.0
    %1048 = vmatpush2.msra.mxu0 0.0
    %1049 = vmatprep.subr.mxu0 0.0
    %1050 = vmatpush2.msra.mxu0 0.0
    %1051 = vmatprep.subr.mxu0 0.0
    %1052 = vmatpush2.msra.mxu0 0.0
    %1053 = vmatprep.subr.mxu0 0.0
    %1054 = vmatpush2.msra.mxu0 0.0
    %1055 = vmatprep.mubr.f32.mxu0 0.0
    %1056 = vmatmul.mubr.f32.gmra.mxu0 %v987
    %v1057 = vpop.f32.mrf.mxu0
    %v1058 = vadd.f32 0.0, %v1057
    %v1059 = vpop.f32.mrf.mxu0
    %1060 = vmatprep.mubr.f32.mxu0 0.0
    %1061 = vmatmul.mubr.f32.gmra.mxu0 %v989
    %v1062 = vpop.f32.mrf.mxu0
    %v1063 = vadd.f32 0.0, %v1062
    %v1064 = vpop.f32.mrf.mxu0
    %1065 = vdwg.mxu0
    %v1066 = vadd.f32 %v979, %v1058
    %v1067 = vadd.f32 %v980, %v1063
    %v1068 = vxor.u32 %v1066, 2147483648
    %v1069 = vxor.u32 %v1067, 2147483648
    %v1070 = vmul.f32 %v1068, 1.442695
    %v1071 = vpow.pop %v1070
    %v1072 = vmul.f32 %v1069, 1.442695
    %v1073 = vpow.pop %v1072
    %v1074 = vadd.f32 %v1071, 1.0
    %v1075 = vadd.f32 %v1073, 1.0
    %v1076 = vrcp.pop %v1074
    %v1077 = vmul.f32 1.0, %v1076
    %v1078 = vrcp.pop %v1075
    %v1079 = vmul.f32 1.0, %v1078
    %v1080 = vtanh.pop %v1066
    %v1081 = vtanh.pop %v1067
    %v1082 = vmul.f32 %v1077, %v964
    %v1083 = vmul.f32 %v1079, %v965
    %1086 = vrot.lane.b32.xlu0 %v1080, 32
    %v1087 = vpop.permute.xlu0 %1086
    %1088 = vrot.lane.b32.xlu0 %v1081, 32
    %v1089 = vpop.permute.xlu0 %1088
    %v1092 = vmul.f32 %v1077, %v1087
    %v1093 = vmul.f32 %v1079, %v1089
    %1096 = vrot.lane.b32.xlu0 %v1092, 32
    %v1097 = vpop.permute.xlu0 %1096
    %1098 = vrot.lane.b32.xlu0 %v1093, 32
    %v1099 = vpop.permute.xlu0 %1098
    %v1102 = vadd.f32 %v1082, %v1097
    %v1103 = vadd.f32 %v1083, %v1099
    %v1104 = vtanh.pop %v1102
    %v1105 = vtanh.pop %v1103
    %1108 = vrot.lane.b32.xlu0 %v1104, 32
    %v1109 = vpop.permute.xlu0 %1108
    %1110 = vrot.lane.b32.xlu0 %v1105, 32
    %v1111 = vpop.permute.xlu0 %1110
    %v1114 = vmul.f32 %v1077, %v1109
    %v1115 = vmul.f32 %v1079, %v1111
    %s1116 = scalar_lea.vmem [#allocation2], 96
    %v1117 = vld [vmem:[%s1116] sm:$0xff]
    %v1118 = vld [vmem:[%s1116 + $0x8] sm:$0xff]
    %1121 = vrot.lane.b32.xlu0 %v1114, 64
    %v1122 = vpop.permute.xlu0 %1121
    %1123 = vrot.lane.b32.xlu0 %v1115, 64
    %v1124 = vpop.permute.xlu0 %1123
    %v1125 = vsel %vm71, %v1122, 0
    %v1127 = vsel %vm71, %v1124, 0
    %1129 = vmatprep.subr.mxu0 0.0
    %1130 = vmatpush1.msra.mxu0 0.0
    %1131 = vmatprep.subr.mxu0 0.0
    %1132 = vmatpush1.msra.mxu0 0.0
    %1133 = vmatprep.subr.mxu0 0.0
    %1134 = vmatpush1.msra.mxu0 0.0
    %1135 = vmatprep.subr.mxu0 0.0
    %1136 = vmatpush1.msra.mxu0 0.0
    %1137 = vmatprep.subr.mxu0 0.0
    %1138 = vmatpush1.msra.mxu0 0.0
    %1139 = vmatprep.subr.mxu0 0.0
    %1140 = vmatpush1.msra.mxu0 0.0
    %1141 = vmatprep.subr.mxu0 0.0
    %1142 = vmatpush1.msra.mxu0 0.0
    %1143 = vmatprep.subr.mxu0 0.0
    %1144 = vmatpush1.msra.mxu0 0.0
    %1145 = vmatprep.subr.mxu0 0.0
    %1146 = vmatpush1.msra.mxu0 0.0
    %1147 = vmatprep.subr.mxu0 0.0
    %1148 = vmatpush1.msra.mxu0 0.0
    %1149 = vmatprep.subr.mxu0 0.0
    %1150 = vmatpush1.msra.mxu0 0.0
    %1151 = vmatprep.subr.mxu0 0.0
    %1152 = vmatpush1.msra.mxu0 0.0
    %1153 = vmatprep.subr.mxu0 0.0
    %1154 = vmatpush1.msra.mxu0 %v39
    %1155 = vmatprep.subr.mxu0 0.0
    %1156 = vmatpush1.msra.mxu0 %v38
    %1157 = vmatprep.subr.mxu0 0.0
    %1158 = vmatpush1.msra.mxu0 %v37
    %1159 = vmatprep.subr.mxu0 0.0
    %1160 = vmatpush1.msra.mxu0 %v36
    %1161 = vmatprep.subr.mxu0 0.0
    %1162 = vmatpush2.msra.mxu0 0.0
    %1163 = vmatprep.subr.mxu0 0.0
    %1164 = vmatpush2.msra.mxu0 0.0
    %1165 = vmatprep.subr.mxu0 0.0
    %1166 = vmatpush2.msra.mxu0 0.0
    %1167 = vmatprep.subr.mxu0 0.0
    %1168 = vmatpush2.msra.mxu0 0.0
    %1169 = vmatprep.subr.mxu0 0.0
    %1170 = vmatpush2.msra.mxu0 0.0
    %1171 = vmatprep.subr.mxu0 0.0
    %1172 = vmatpush2.msra.mxu0 0.0
    %1173 = vmatprep.subr.mxu0 0.0
    %1174 = vmatpush2.msra.mxu0 0.0
    %1175 = vmatprep.subr.mxu0 0.0
    %1176 = vmatpush2.msra.mxu0 0.0
    %1177 = vmatprep.subr.mxu0 0.0
    %1178 = vmatpush2.msra.mxu0 0.0
    %1179 = vmatprep.subr.mxu0 0.0
    %1180 = vmatpush2.msra.mxu0 0.0
    %1181 = vmatprep.subr.mxu0 0.0
    %1182 = vmatpush2.msra.mxu0 0.0
    %1183 = vmatprep.subr.mxu0 0.0
    %1184 = vmatpush2.msra.mxu0 0.0
    %1185 = vmatprep.subr.mxu0 0.0
    %1186 = vmatpush2.msra.mxu0 0.0
    %1187 = vmatprep.subr.mxu0 0.0
    %1188 = vmatpush2.msra.mxu0 0.0
    %1189 = vmatprep.subr.mxu0 0.0
    %1190 = vmatpush2.msra.mxu0 0.0
    %1191 = vmatprep.subr.mxu0 0.0
    %1192 = vmatpush2.msra.mxu0 0.0
    %1193 = vmatprep.mubr.f32.mxu0 0.0
    %1194 = vmatmul.mubr.f32.gmra.mxu0 %v1125
    %v1195 = vpop.f32.mrf.mxu0
    %v1196 = vadd.f32 0.0, %v1195
    %v1197 = vpop.f32.mrf.mxu0
    %1198 = vmatprep.mubr.f32.mxu0 0.0
    %1199 = vmatmul.mubr.f32.gmra.mxu0 %v1127
    %v1200 = vpop.f32.mrf.mxu0
    %v1201 = vadd.f32 0.0, %v1200
    %v1202 = vpop.f32.mrf.mxu0
    %1203 = vdwg.mxu0
    %v1204 = vadd.f32 %v1117, %v1196
    %v1205 = vadd.f32 %v1118, %v1201
    %v1206 = vxor.u32 %v1204, 2147483648
    %v1207 = vxor.u32 %v1205, 2147483648
    %v1208 = vmul.f32 %v1206, 1.442695
    %v1209 = vpow.pop %v1208
    %v1210 = vmul.f32 %v1207, 1.442695
    %v1211 = vpow.pop %v1210
    %v1212 = vadd.f32 %v1209, 1.0
    %v1213 = vadd.f32 %v1211, 1.0
    %v1214 = vrcp.pop %v1212
    %v1215 = vmul.f32 1.0, %v1214
    %v1216 = vrcp.pop %v1213
    %v1217 = vmul.f32 1.0, %v1216
    %v1218 = vtanh.pop %v1204
    %v1219 = vtanh.pop %v1205
    %v1220 = vmul.f32 %v1215, %v1102
    %v1221 = vmul.f32 %v1217, %v1103
    %1224 = vrot.lane.b32.xlu0 %v1218, 32
    %v1225 = vpop.permute.xlu0 %1224
    %1226 = vrot.lane.b32.xlu0 %v1219, 32
    %v1227 = vpop.permute.xlu0 %1226
    %v1230 = vmul.f32 %v1215, %v1225
    %v1231 = vmul.f32 %v1217, %v1227
    %1234 = vrot.lane.b32.xlu0 %v1230, 32
    %v1235 = vpop.permute.xlu0 %1234
    %1236 = vrot.lane.b32.xlu0 %v1231, 32
    %v1237 = vpop.permute.xlu0 %1236
    %v1240 = vadd.f32 %v1220, %v1235
    %v1241 = vadd.f32 %v1221, %v1237
    %v1242 = vtanh.pop %v1240
    %v1243 = vtanh.pop %v1241
    %1246 = vrot.lane.b32.xlu0 %v1242, 32
    %v1247 = vpop.permute.xlu0 %1246
    %1248 = vrot.lane.b32.xlu0 %v1243, 32
    %v1249 = vpop.permute.xlu0 %1248
    %v1252 = vmul.f32 %v1215, %v1247
    %v1253 = vmul.f32 %v1217, %v1249
    %s1254 = scalar_lea.vmem [#allocation2], 112
    %v1255 = vld [vmem:[%s1254] sm:$0xff]
    %v1256 = vld [vmem:[%s1254 + $0x8] sm:$0xff]
    %1259 = vrot.lane.b32.xlu0 %v1252, 64
    %v1260 = vpop.permute.xlu0 %1259
    %1261 = vrot.lane.b32.xlu0 %v1253, 64
    %v1262 = vpop.permute.xlu0 %1261
    %v1263 = vsel %vm71, %v1260, 0
    %v1265 = vsel %vm71, %v1262, 0
    %1267 = vmatprep.subr.mxu0 0.0
    %1268 = vmatpush1.msra.mxu0 0.0
    %1269 = vmatprep.subr.mxu0 0.0
    %1270 = vmatpush1.msra.mxu0 0.0
    %1271 = vmatprep.subr.mxu0 0.0
    %1272 = vmatpush1.msra.mxu0 0.0
    %1273 = vmatprep.subr.mxu0 0.0
    %1274 = vmatpush1.msra.mxu0 0.0
    %1275 = vmatprep.subr.mxu0 0.0
    %1276 = vmatpush1.msra.mxu0 0.0
    %1277 = vmatprep.subr.mxu0 0.0
    %1278 = vmatpush1.msra.mxu0 0.0
    %1279 = vmatprep.subr.mxu0 0.0
    %1280 = vmatpush1.msra.mxu0 0.0
    %1281 = vmatprep.subr.mxu0 0.0
    %1282 = vmatpush1.msra.mxu0 0.0
    %1283 = vmatprep.subr.mxu0 0.0
    %1284 = vmatpush1.msra.mxu0 0.0
    %1285 = vmatprep.subr.mxu0 0.0
    %1286 = vmatpush1.msra.mxu0 0.0
    %1287 = vmatprep.subr.mxu0 0.0
    %1288 = vmatpush1.msra.mxu0 0.0
    %1289 = vmatprep.subr.mxu0 0.0
    %1290 = vmatpush1.msra.mxu0 0.0
    %1291 = vmatprep.subr.mxu0 0.0
    %1292 = vmatpush1.msra.mxu0 %v39
    %1293 = vmatprep.subr.mxu0 0.0
    %1294 = vmatpush1.msra.mxu0 %v38
    %1295 = vmatprep.subr.mxu0 0.0
    %1296 = vmatpush1.msra.mxu0 %v37
    %1297 = vmatprep.subr.mxu0 0.0
    %1298 = vmatpush1.msra.mxu0 %v36
    %1299 = vmatprep.subr.mxu0 0.0
    %1300 = vmatpush2.msra.mxu0 0.0
    %1301 = vmatprep.subr.mxu0 0.0
    %1302 = vmatpush2.msra.mxu0 0.0
    %1303 = vmatprep.subr.mxu0 0.0
    %1304 = vmatpush2.msra.mxu0 0.0
    %1305 = vmatprep.subr.mxu0 0.0
    %1306 = vmatpush2.msra.mxu0 0.0
    %1307 = vmatprep.subr.mxu0 0.0
    %1308 = vmatpush2.msra.mxu0 0.0
    %1309 = vmatprep.subr.mxu0 0.0
    %1310 = vmatpush2.msra.mxu0 0.0
    %1311 = vmatprep.subr.mxu0 0.0
    %1312 = vmatpush2.msra.mxu0 0.0
    %1313 = vmatprep.subr.mxu0 0.0
    %1314 = vmatpush2.msra.mxu0 0.0
    %1315 = vmatprep.subr.mxu0 0.0
    %1316 = vmatpush2.msra.mxu0 0.0
    %1317 = vmatprep.subr.mxu0 0.0
    %1318 = vmatpush2.msra.mxu0 0.0
    %1319 = vmatprep.subr.mxu0 0.0
    %1320 = vmatpush2.msra.mxu0 0.0
    %1321 = vmatprep.subr.mxu0 0.0
    %1322 = vmatpush2.msra.mxu0 0.0
    %1323 = vmatprep.subr.mxu0 0.0
    %1324 = vmatpush2.msra.mxu0 0.0
    %1325 = vmatprep.subr.mxu0 0.0
    %1326 = vmatpush2.msra.mxu0 0.0
    %1327 = vmatprep.subr.mxu0 0.0
    %1328 = vmatpush2.msra.mxu0 0.0
    %1329 = vmatprep.subr.mxu0 0.0
    %1330 = vmatpush2.msra.mxu0 0.0
    %1331 = vmatprep.mubr.f32.mxu0 0.0
    %1332 = vmatmul.mubr.f32.gmra.mxu0 %v1263
    %v1333 = vpop.f32.mrf.mxu0
    %v1334 = vadd.f32 0.0, %v1333
    %v1335 = vpop.f32.mrf.mxu0
    %1336 = vmatprep.mubr.f32.mxu0 0.0
    %1337 = vmatmul.mubr.f32.gmra.mxu0 %v1265
    %v1338 = vpop.f32.mrf.mxu0
    %v1339 = vadd.f32 0.0, %v1338
    %v1340 = vpop.f32.mrf.mxu0
    %1341 = vdwg.mxu0
    %v1342 = vadd.f32 %v1255, %v1334
    %v1343 = vadd.f32 %v1256, %v1339
    %v1344 = vxor.u32 %v1342, 2147483648
    %v1345 = vxor.u32 %v1343, 2147483648
    %v1346 = vmul.f32 %v1344, 1.442695
    %v1347 = vpow.pop %v1346
    %v1348 = vmul.f32 %v1345, 1.442695
    %v1349 = vpow.pop %v1348
    %v1350 = vadd.f32 %v1347, 1.0
    %v1351 = vadd.f32 %v1349, 1.0
    %v1352 = vrcp.pop %v1350
    %v1353 = vmul.f32 1.0, %v1352
    %v1354 = vrcp.pop %v1351
    %v1355 = vmul.f32 1.0, %v1354
    %v1356 = vtanh.pop %v1342
    %v1357 = vtanh.pop %v1343
    %v1358 = vmul.f32 %v1353, %v1240
    %v1359 = vmul.f32 %v1355, %v1241
    %1362 = vrot.lane.b32.xlu0 %v1356, 32
    %v1363 = vpop.permute.xlu0 %1362
    %1364 = vrot.lane.b32.xlu0 %v1357, 32
    %v1365 = vpop.permute.xlu0 %1364
    %v1368 = vmul.f32 %v1353, %v1363
    %v1369 = vmul.f32 %v1355, %v1365
    %1372 = vrot.lane.b32.xlu0 %v1368, 32
    %v1373 = vpop.permute.xlu0 %1372
    %1374 = vrot.lane.b32.xlu0 %v1369, 32
    %v1375 = vpop.permute.xlu0 %1374
    %v1378 = vadd.f32 %v1358, %v1373
    %v1379 = vadd.f32 %v1359, %v1375
    %v1380 = vtanh.pop %v1378
    %v1381 = vtanh.pop %v1379
    %1384 = vrot.lane.b32.xlu0 %v1380, 32
    %v1385 = vpop.permute.xlu0 %1384
    %1386 = vrot.lane.b32.xlu0 %v1381, 32
    %v1387 = vpop.permute.xlu0 %1386
    %v1390 = vmul.f32 %v1353, %v1385
    %v1391 = vmul.f32 %v1355, %v1387
    %1394 = vrot.lane.b32.xlu0 %v1390, 64
    %v1395 = vpop.permute.xlu0 %1394
    %1396 = vrot.lane.b32.xlu0 %v1391, 64
    %v1397 = vpop.permute.xlu0 %1396
    %1400 = vst.msk [vmem:[#allocation5] sm:$0xff] %vm71, %v1395
    %1401 = vst.msk [vmem:[#allocation5 + $0x8] sm:$0xff] %vm71, %v1397
    %1404 = vrot.lane.b32.xlu0 %v1378, 96
    %v1405 = vpop.permute.xlu0 %1404
    %1406 = vrot.lane.b32.xlu0 %v1379, 96
    %v1407 = vpop.permute.xlu0 %1406
    %1410 = vst.msk [vmem:[#allocation7] sm:$0xff] %vm71, %v1405
    %1411 = vst.msk [vmem:[#allocation7 + $0x8] sm:$0xff] %vm71, %v1407
    // Predicated region
    $region26: #{tpu_custom_call.1} parent=1 // pred_check
      %p1412 = pneg %p25
    $region27: #{tpu_custom_call.1} parent=1 // pred_check_branch
      %1414 = sbr.rel (%p1412) target = $region29
    $region28: #{tpu_custom_call.1} parent=1 // pred_region
      %v1415 = vsel %vm71, %v1395, 0
      %v1417 = vsel %vm71, %v1397, 0
      %1419 = vmatprep.subr.mxu0 0.0
      %1420 = vmatpush1.msra.mxu0 0.0
      %1421 = vmatprep.subr.mxu0 0.0
      %1422 = vmatpush1.msra.mxu0 0.0
      %1423 = vmatprep.subr.mxu0 0.0
      %1424 = vmatpush1.msra.mxu0 0.0
      %1425 = vmatprep.subr.mxu0 0.0
      %1426 = vmatpush1.msra.mxu0 0.0
      %1427 = vmatprep.subr.mxu0 0.0
      %1428 = vmatpush1.msra.mxu0 0.0
      %1429 = vmatprep.subr.mxu0 0.0
      %1430 = vmatpush1.msra.mxu0 0.0
      %1431 = vmatprep.subr.mxu0 0.0
      %1432 = vmatpush1.msra.mxu0 0.0
      %1433 = vmatprep.subr.mxu0 0.0
      %1434 = vmatpush1.msra.mxu0 0.0
      %1435 = vmatprep.subr.mxu0 0.0
      %1436 = vmatpush1.msra.mxu0 0.0
      %1437 = vmatprep.subr.mxu0 0.0
      %1438 = vmatpush1.msra.mxu0 0.0
      %1439 = vmatprep.subr.mxu0 0.0
      %1440 = vmatpush1.msra.mxu0 0.0
      %1441 = vmatprep.subr.mxu0 0.0
      %1442 = vmatpush1.msra.mxu0 0.0
      %1443 = vmatprep.subr.mxu0 0.0
      %1444 = vmatpush1.msra.mxu0 %v43
      %1445 = vmatprep.subr.mxu0 0.0
      %1446 = vmatpush1.msra.mxu0 %v42
      %1447 = vmatprep.subr.mxu0 0.0
      %1448 = vmatpush1.msra.mxu0 %v41
      %1449 = vmatprep.subr.mxu0 0.0
      %1450 = vmatpush1.msra.mxu0 %v40
      %1451 = vmatprep.subr.mxu0 0.0
      %1452 = vmatpush2.msra.mxu0 0.0
      %1453 = vmatprep.subr.mxu0 0.0
      %1454 = vmatpush2.msra.mxu0 0.0
      %1455 = vmatprep.subr.mxu0 0.0
      %1456 = vmatpush2.msra.mxu0 0.0
      %1457 = vmatprep.subr.mxu0 0.0
      %1458 = vmatpush2.msra.mxu0 0.0
      %1459 = vmatprep.subr.mxu0 0.0
      %1460 = vmatpush2.msra.mxu0 0.0
      %1461 = vmatprep.subr.mxu0 0.0
      %1462 = vmatpush2.msra.mxu0 0.0
      %1463 = vmatprep.subr.mxu0 0.0
      %1464 = vmatpush2.msra.mxu0 0.0
      %1465 = vmatprep.subr.mxu0 0.0
      %1466 = vmatpush2.msra.mxu0 0.0
      %1467 = vmatprep.subr.mxu0 0.0
      %1468 = vmatpush2.msra.mxu0 0.0
      %1469 = vmatprep.subr.mxu0 0.0
      %1470 = vmatpush2.msra.mxu0 0.0
      %1471 = vmatprep.subr.mxu0 0.0
      %1472 = vmatpush2.msra.mxu0 0.0
      %1473 = vmatprep.subr.mxu0 0.0
      %1474 = vmatpush2.msra.mxu0 0.0
      %1475 = vmatprep.subr.mxu0 0.0
      %1476 = vmatpush2.msra.mxu0 0.0
      %1477 = vmatprep.subr.mxu0 0.0
      %1478 = vmatpush2.msra.mxu0 0.0
      %1479 = vmatprep.subr.mxu0 0.0
      %1480 = vmatpush2.msra.mxu0 0.0
      %1481 = vmatprep.subr.mxu0 0.0
      %1482 = vmatpush2.msra.mxu0 0.0
      %1483 = vmatprep.mubr.f32.mxu0 0.0
      %1484 = vmatmul.mubr.f32.gmra.mxu0 %v1415
      %v1485 = vpop.f32.mrf.mxu0
      %v1486 = vadd.f32 0.0, %v1485
      %v1487 = vpop.f32.mrf.mxu0
      %1488 = vmatprep.mubr.f32.mxu0 0.0
      %1489 = vmatmul.mubr.f32.gmra.mxu0 %v1417
      %v1490 = vpop.f32.mrf.mxu0
      %v1491 = vadd.f32 0.0, %v1490
      %v1492 = vpop.f32.mrf.mxu0
      %1493 = vdwg.mxu0
      %v1494 = vxor.u32 %v1486, 2147483648
      %v1495 = vxor.u32 %v1491, 2147483648
      %v1496 = vmul.f32 %v1494, 1.442695
      %v1497 = vpow.pop %v1496
      %v1498 = vmul.f32 %v1495, 1.442695
      %v1499 = vpow.pop %v1498
      %v1500 = vadd.f32 %v1497, 1.0
      %v1501 = vadd.f32 %v1499, 1.0
      %v1502 = vrcp.pop %v1500
      %v1503 = vmul.f32 1.0, %v1502
      %v1504 = vrcp.pop %v1501
      %v1505 = vmul.f32 1.0, %v1504
      %1506 = vst.msk [vmem:[#allocation3] sm:$0xff] %vm71, %v1503
      %1507 = vst.msk [vmem:[#allocation3 + $0x8] sm:$0xff] %vm71, %v1505
    $region29: #{tpu_custom_call.1} parent=1 // pred_fallthru
      _
    // Predicated region
    $region30: #{tpu_custom_call.1} parent=1 // pred_check
      _
    $region31: #{tpu_custom_call.1} parent=1 // pred_check_branch
      %1509 = sbr.rel (0) target = $region33
    $region32: #{tpu_custom_call.1} parent=1 // pred_region
      %s1511 = ssub.s32 256, 256
      %1512 = vsyncadd [#allocation4], %s1511
      %s1513 = sshll.u32 [#allocation3], 4
      %s1514 = int_to_ptr.vmem [resolvable:$true] %s1513
      %1519 = dma.vmem_to_hbm [thread:$0]  %s1514, 256, %s5, [#allocation4], 128, 128, 8
    $region33: #{tpu_custom_call.1} parent=1 // pred_fallthru
      _
    // Predicated region
    $region34: #{tpu_custom_call.1} parent=1 // pred_check
      _
    $region35: #{tpu_custom_call.1} parent=1 // pred_check_branch
      %1521 = sbr.rel (0) target = $region37
    $region36: #{tpu_custom_call.1} parent=1 // pred_region
      %s1523 = ssub.s32 256, 256
      %1524 = vsyncadd [#allocation6], %s1523
      %s1525 = sshll.u32 [#allocation5], 4
      %s1526 = int_to_ptr.vmem [resolvable:$true] %s1525
      %1531 = dma.vmem_to_hbm [thread:$0]  %s1526, 256, %s6, [#allocation6], 128, 128, 8
    $region37: #{tpu_custom_call.1} parent=1 // pred_fallthru
      _
    // Predicated region
    $region38: #{tpu_custom_call.1} parent=1 // pred_check
      _
    $region39: #{tpu_custom_call.1} parent=1 // pred_check_branch
      %1533 = sbr.rel (0) target = $region41
    $region40: #{tpu_custom_call.1} parent=1 // pred_region
      %s1535 = ssub.s32 256, 256
      %1536 = vsyncadd [#allocation6], %s1535
      %s1537 = sshll.u32 [#allocation7], 4
      %s1538 = int_to_ptr.vmem [resolvable:$true] %s1537
      %1543 = dma.vmem_to_hbm [thread:$0]  %s1538, 256, %s7, [#allocation6], 128, 128, 8
    $region41: #{tpu_custom_call.1} parent=1 // pred_fallthru
      _
    // Predicated region
    $region42: #{tpu_custom_call.1} parent=1 // pred_check
      _
    $region43: #{tpu_custom_call.1} parent=1 // pred_check_branch
      %1545 = sbr.rel (0) target = $region45
    $region44: #{tpu_custom_call.1} parent=1 // pred_region
      %1546 = dma.done [#allocation4], 256
    $region45: #{tpu_custom_call.1} parent=1 // pred_fallthru
      _
    // Predicated region
    $region46: #{tpu_custom_call.1} parent=1 // pred_check
      _
    $region47: #{tpu_custom_call.1} parent=1 // pred_check_branch
      %1548 = sbr.rel (0) target = $region49
    $region48: #{tpu_custom_call.1} parent=1 // pred_region
      %1549 = dma.done [#allocation6], 256
    $region49: #{tpu_custom_call.1} parent=1 // pred_fallthru
      _
    // Predicated region
    $region50: #{tpu_custom_call.1} parent=1 // pred_check
      _
    $region51: #{tpu_custom_call.1} parent=1 // pred_check_branch
      %1551 = sbr.rel (0) target = $region53
    $region52: #{tpu_custom_call.1} parent=1 // pred_region
      %1552 = dma.done [#allocation6], 256
    $region53: #{tpu_custom_call.1} parent=1 // pred_fallthru
      _
    %1553 = vsyncpa [#allocation4], 1
    %1554 = vsyncpa [#allocation6], 1

</llo_original>
